<compile_context>
chip_gen: v7x
topology: tpu7x:2x2x1
jax: 0.10.0
libtpu: 0.0.40
codegen_flags: <defaults>
</compile_context>

<pallas_src>
import numpy as np
import jax
import jax.numpy as jnp
from jax import lax
from jax.experimental import pallas as pl
from jax.experimental.pallas import tpu as pltpu


def _padding(downsample, kernel_size):
    """Compute required padding (same formula as the PyTorch module)."""
    return max(0, int(np.floor((kernel_size - downsample + 1) / 2)))


def _round_up(x, m):
    return ((x + m - 1) // m) * m


def _make_kernel(*, K, D, L, TL, TL2, CH, CH8, XR, P2, Ltot, has_wskip):
    """Fused ResBlock1d kernel for a static configuration."""
    cdt = jnp.bfloat16

    def body(x_hbm, y_ref, w1_ref, w2_ref, ws_ref,
             s1_ref, b1_ref, s2_ref, b2_ref,
             xo_ref, yo_ref, xbuf, xsem, hp_ref):
        n = pl.program_id(0)
        j = pl.program_id(1)
        nT = pl.num_programs(1)

        # ---- x window: manual double-buffered DMA straight from the
        #      (unduplicated) HBM copy of x; next tile prefetched during compute.
        def start(jj, slot):
            pltpu.make_async_copy(
                x_hbm.at[pl.ds(n * Ltot + jj * TL, XR), :],
                xbuf.at[slot], xsem.at[slot]).start()

        slot = j % 2

        @pl.when(j == 0)                       # prime the pipeline (per batch row)
        def _():
            start(0, 0)

        pltpu.make_async_copy(x_hbm.at[pl.ds(0, XR), :],
                              xbuf.at[slot], xsem.at[slot]).wait()

        @pl.when(j + 1 < nT)                   # prefetch next window
        def _():
            start(j + 1, 1 - slot)

        xv = xbuf.at[slot]

        # ---- conv1 (stride 1): K accumulated lane-dense MXU matmuls, f32 acc.
        acc1 = jnp.dot(xv[pl.ds(0, CH8), :], w1_ref[0],
                       preferred_element_type=jnp.float32)
        for t in range(1, K):
            acc1 = acc1 + jnp.dot(xv[pl.ds(t, CH8), :], w1_ref[t],
                                  preferred_element_type=jnp.float32)

        # ---- bn1 (folded scale/shift) + relu ; dropout1 == identity (eval).
        hp_ref[...] = jnp.maximum(acc1 * s1_ref[...] + b1_ref[...], 0.0)

        # Zero the rows that fall into conv2's zero-padding halo.  Only tiles
        # whose conv1 row range leaves [0, L) pay for the mask.
        @pl.when(jnp.logical_or(j * TL < P2, j * TL + (CH - P2) > L))
        def _():
            r = j * TL - P2 + lax.broadcasted_iota(jnp.int32, (CH8, 1), 0)
            valid = jnp.logical_and(r >= 0, r < L)
            hp_ref[...] = hp_ref[...] * valid.astype(jnp.float32)

        # ---- skip path: MaxPool1d(D, D) as a max over the phase axis (VPU only),
        #      1x1 conv fused into the conv2 accumulator (plain add if no conv).
        ys = y_ref[0, 0, 0, :, :]
        for r in range(1, D):
            ys = jnp.maximum(ys, y_ref[0, 0, r, :, :])
        if has_wskip:
            acc2 = jnp.dot(ys, ws_ref[...], preferred_element_type=jnp.float32)
        else:
            acc2 = ys.astype(jnp.float32)

        # ---- conv2 (stride D): K accumulated matmuls on stride-D taps of hp.
        for t in range(K):
            if D > 1:
                tap = hp_ref[pl.ds(t, TL2, stride=D), :]
            else:
                tap = hp_ref[pl.ds(t, TL2), :]
            acc2 = acc2 + jnp.dot(tap.astype(cdt), w2_ref[t],
                                  preferred_element_type=jnp.float32)

        # ---- y_out = conv2 + skip ; x_out = relu(bn2(y_out)); dropout2 identity.
        yo_ref[0, 0, :, :] = acc2.astype(yo_ref.dtype)
        xo_ref[0, 0, :, :] = jnp.maximum(
            acc2 * s2_ref[...] + b2_ref[...], 0.0).astype(xo_ref.dtype)

    if has_wskip:
        return body

    def body_noskip(x_hbm, y_ref, w1_ref, w2_ref,
                    s1_ref, b1_ref, s2_ref, b2_ref,
                    xo_ref, yo_ref, xbuf, xsem, hp_ref):
        return body(x_hbm, y_ref, w1_ref, w2_ref, None,
                    s1_ref, b1_ref, s2_ref, b2_ref,
                    xo_ref, yo_ref, xbuf, xsem, hp_ref)

    return body_noskip


def resblock1d_forward(x_ncl, y_ncl, params, *, downsample, kernel_size,
                       tile_l2=None, out_dtype=jnp.float32):
    """Pallas ResBlock1d forward. Inputs/outputs in PyTorch NCL layout."""
    if kernel_size % 2 == 0:
        raise ValueError("only odd kernel_size is supported")
    K, D = int(kernel_size), int(downsample)
    N, Cin, L = x_ncl.shape
    Cout = params["w1"].shape[0]
    P1 = _padding(1, K)
    P2 = _padding(D, K)
    L2 = (L + 2 * P2 - K) // D + 1
    if D > 1 and L2 != L // D:
        raise ValueError(
            f"conv2 output length ({L2}) != maxpool output length ({L // D}); "
            f"this (kernel_size={K}, downsample={D}, length={L}) combination is "
            "not supported by ResBlock1d")
    has_wskip = params.get("wskip") is not None
    if not has_wskip and Cin != Cout:
        raise ValueError("wskip is required when n_filters_in != n_filters_out")

    cdt = jnp.bfloat16
    CPI = _round_up(Cin, 128)            # lane-dense (padded) channel counts
    CPO = _round_up(Cout, 128)

    # ---- tile sizing: multiple-of-8 output rows, VMEM-budget aware ----
    if tile_l2 is None:
        tile_l2 = 512
    TL2 = max(8, _round_up(min(int(tile_l2), L2), 8))

    w_bytes = 2 * 2 * (K * CPI * CPO + K * CPO * CPO + CPI * CPO)  # bf16, 2 bufs
    obytes = jnp.dtype(out_dtype).itemsize

    def tile_bytes(tl2):
        tl = tl2 * D
        ch8 = _round_up(tl + K - D, 8)
        xr = _round_up(ch8 + K - 1, 8)
        b = 2 * xr * CPI * 2                       # x window double buffer (bf16)
        b += 2 * D * tl2 * CPI * 2                 # y blocks (double buffered)
        b += 2 * 2 * tl2 * CPO * obytes            # two outputs, double buffered
        b += ch8 * CPO * 4                         # hp scratch (f32)
        b += ch8 * CPO * 4 + tl2 * CPO * 4         # live f32 accumulators
        return b

    budget = 20 * 2 ** 20                          # stay well inside v7x's 64 MiB
    while TL2 > 8 and w_bytes + tile_bytes(TL2) > budget:
        TL2 = max(8, _round_up(TL2 // 2, 8))

    nT = pl.cdiv(L2, TL2)
    TL = TL2 * D                                   # input rows consumed per tile
    CH = TL + K - D                                # conv1 rows needed per tile
    CH8 = _round_up(CH, 8)
    XR = _round_up(CH8 + K - 1, 8)                 # x rows DMA'd per tile
    HP = P1 + P2                                   # head padding of x

    # ---- x: NCL -> NLC, bf16, channel-pad, halo pad, flatten batch into rows ----
    Ltot = _round_up(max((nT - 1) * TL + XR, HP + L), 8)
    x = jnp.transpose(x_ncl, (0, 2, 1)).astype(cdt)
    x = jnp.pad(x, ((0, 0), (HP, Ltot - HP - L), (0, CPI - Cin)))
    x_p = x.reshape(N * Ltot, CPI)                 # stays unduplicated in HBM

    # ---- y: NCL -> NLC, bf16, channel-pad, rows grouped by pooling phase ----
    y = jnp.transpose(y_ncl, (0, 2, 1)).astype(cdt)
    y = jnp.pad(y[:, :L2 * D, :],
                ((0, 0), (0, nT * TL - L2 * D), (0, CPI - Cin)))
    y_t = y.reshape(N, nT, TL2, D, CPI).transpose(0, 1, 3, 2, 4)  # (N,nT,D,TL2,CPI)

    # ---- weights: torch (Cout, Cin, K) -> (K, Cin_p, Cout_p), zero padded ----
    w1 = jnp.pad(jnp.transpose(params["w1"], (2, 1, 0)),
                 ((0, 0), (0, CPI - Cin), (0, CPO - Cout))).astype(cdt)
    w2 = jnp.pad(jnp.transpose(params["w2"], (2, 1, 0)),
                 ((0, 0), (0, CPO - Cout), (0, CPO - Cout))).astype(cdt)
    if has_wskip:
        ws = jnp.pad(jnp.transpose(params["wskip"][:, :, 0], (1, 0)),
                     ((0, CPI - Cin), (0, CPO - Cout))).astype(cdt)

    # ---- BatchNorm (running stats) folded into per-channel scale/shift ----
    eps = 1e-5

    def fold(g, b, m, v):
        s = (g / jnp.sqrt(v + eps)).astype(jnp.float32)
        sh = (b - m * s).astype(jnp.float32)
        pad = (0, CPO - Cout)
        return jnp.pad(s, pad).reshape(1, CPO), jnp.pad(sh, pad).reshape(1, CPO)

    s1, b1 = fold(params["bn1_gamma"], params["bn1_beta"],
                  params["bn1_mean"], params["bn1_var"])
    s2, b2 = fold(params["bn2_gamma"], params["bn2_beta"],
                  params["bn2_mean"], params["bn2_var"])

    kernel = _make_kernel(K=K, D=D, L=L, TL=TL, TL2=TL2, CH=CH, CH8=CH8,
                          XR=XR, P2=P2, Ltot=Ltot, has_wskip=has_wskip)

    def full_spec(shape):
        zeros = (0,) * len(shape)
        return pl.BlockSpec(shape, lambda n, j: zeros)

    in_specs = [
        pl.BlockSpec(memory_space=pl.ANY),                                # x in HBM
        pl.BlockSpec((1, 1, D, TL2, CPI), lambda n, j: (n, j, 0, 0, 0)),  # y tiles
        full_spec(w1.shape), full_spec(w2.shape),
    ]
    inputs = [x_p, y_t, w1, w2]
    if has_wskip:
        in_specs.append(full_spec(ws.shape))
        inputs.append(ws)
    in_specs += [full_spec(s1.shape), full_spec(b1.shape),
                 full_spec(s2.shape), full_spec(b2.shape)]
    inputs += [s1, b1, s2, b2]

    out_spec = pl.BlockSpec((1, 1, TL2, CPO), lambda n, j: (n, j, 0, 0))
    out_struct = jax.ShapeDtypeStruct((N, nT, TL2, CPO), out_dtype)

    vmem_limit = int(min(max(2 * (w_bytes + tile_bytes(TL2)) + (4 << 20), 32 << 20),
                         56 << 20))

    xo, yo = pl.pallas_call(
        kernel,
        grid=(N, nT),
        in_specs=in_specs,
        out_specs=(out_spec, out_spec),
        out_shape=(out_struct, out_struct),
        scratch_shapes=[
            pltpu.VMEM((2, XR, CPI), cdt),         # x window double buffer
            pltpu.SemaphoreType.DMA((2,)),
            pltpu.VMEM((CH8, CPO), jnp.float32),   # conv1/bn1/relu tile (f32)
        ],
        compiler_params=pltpu.CompilerParams(
            dimension_semantics=("parallel", "arbitrary"),
            vmem_limit_bytes=vmem_limit),
    )(*inputs)

    # (N, nT, TL2, CPO) -> NCL, drop channel/length padding.
    xo = xo.reshape(N, nT * TL2, CPO)[:, :L2, :Cout]
    yo = yo.reshape(N, nT * TL2, CPO)[:, :L2, :Cout]
    return jnp.transpose(xo, (0, 2, 1)), jnp.transpose(yo, (0, 2, 1))


def ref_forward(x, y, params, downsample, kernel_size):
    """Pure-JAX (non-Pallas) reference with PyTorch semantics, NCL layout."""
    eps = 1e-5
    K, D = kernel_size, downsample
    hi = lax.Precision.HIGHEST

    def bn(h, g, b, m, v):
        return ((h - m[None, :, None]) / jnp.sqrt(v + eps)[None, :, None]
                * g[None, :, None] + b[None, :, None])

    ys = y
    if D > 1:
        ys = lax.reduce_window(ys, -jnp.inf, lax.max, (1, 1, D), (1, 1, D), "VALID")
    if params.get("wskip") is not None:
        ys = lax.conv_general_dilated(ys, params["wskip"], (1,), [(0, 0)],
                                      dimension_numbers=("NCH", "OIH", "NCH"),
                                      precision=hi)
    p1 = _padding(1, K)
    h = lax.conv_general_dilated(x, params["w1"], (1,), [(p1, p1)],
                                 dimension_numbers=("NCH", "OIH", "NCH"), precision=hi)
    h = jnp.maximum(bn(h, params["bn1_gamma"], params["bn1_beta"],
                       params["bn1_mean"], params["bn1_var"]), 0.0)
    p2 = _padding(D, K)
    h = lax.conv_general_dilated(h, params["w2"], (D,), [(p2, p2)],
                                 dimension_numbers=("NCH", "OIH", "NCH"), precision=hi)
    z = h + ys
    xo = jnp.maximum(bn(z, params["bn2_gamma"], params["bn2_beta"],
                        params["bn2_mean"], params["bn2_var"]), 0.0)
    return xo, z


def _bf16_round(a):
    return a.astype(jnp.bfloat16).astype(jnp.float32)


if __name__ == "__main__":
    def run_case(seed, N, Cin, Cout, L, K, D, has_skip_conv, tile_l2,
                 out_dtype=jnp.float32, tol=2e-2):
        key = jax.random.PRNGKey(0)
        key = jax.random.fold_in(key, seed)
        ks = jax.random.split(key, 13)
        params = dict(
            w1=_bf16_round(0.1 * jax.random.normal(ks[0], (Cout, Cin, K), jnp.float32)),
            w2=_bf16_round(0.1 * jax.random.normal(ks[1], (Cout, Cout, K), jnp.float32)),
            wskip=(_bf16_round(0.1 * jax.random.normal(ks[2], (Cout, Cin, 1), jnp.float32))
                   if has_skip_conv else None),
            bn1_gamma=1.0 + 0.1 * jax.random.normal(ks[3], (Cout,), jnp.float32),
            bn1_beta=0.1 * jax.random.normal(ks[4], (Cout,), jnp.float32),
            bn1_mean=0.1 * jax.random.normal(ks[5], (Cout,), jnp.float32),
            bn1_var=jnp.abs(jax.random.normal(ks[6], (Cout,), jnp.float32)) + 0.5,
            bn2_gamma=1.0 + 0.1 * jax.random.normal(ks[7], (Cout,), jnp.float32),
            bn2_beta=0.1 * jax.random.normal(ks[8], (Cout,), jnp.float32),
            bn2_mean=0.1 * jax.random.normal(ks[9], (Cout,), jnp.float32),
            bn2_var=jnp.abs(jax.random.normal(ks[10], (Cout,), jnp.float32)) + 0.5,
        )
        x = _bf16_round(jax.random.normal(ks[11], (N, Cin, L), jnp.float32))
        y = _bf16_round(jax.random.normal(ks[12], (N, Cin, L), jnp.float32))

        xo, yo = resblock1d_forward(x, y, params, downsample=D, kernel_size=K,
                                    tile_l2=tile_l2, out_dtype=out_dtype)
        jax.block_until_ready((xo, yo))

        xr, yr = ref_forward(x, y, params, D, K)
        xo32 = np.asarray(jnp.asarray(xo, jnp.float32))
        yo32 = np.asarray(jnp.asarray(yo, jnp.float32))
        np.testing.assert_allclose(xo32, np.asarray(xr), rtol=tol, atol=tol)
        np.testing.assert_allclose(yo32, np.asarray(yr), rtol=tol, atol=tol)

    # Small canonical config: downsample + channel change (maxpool + 1x1 skip).
    run_case(0, N=2, Cin=4, Cout=8, L=16, K=3, D=2, has_skip_conv=True, tile_l2=None)
    # Multi-tile pipeline with a non-divisible tail tile (L2=60, tile=16 -> 4 tiles),
    # larger kernel size, exercises the manual DMA prefetch chain.
    run_case(1, N=2, Cin=16, Cout=32, L=120, K=5, D=2, has_skip_conv=True, tile_l2=16)
    # No skip-connection layers (D=1, Cin == Cout), multi-tile, bf16 outputs.
    run_case(2, N=1, Cin=8, Cout=8, L=32, K=3, D=1, has_skip_conv=False, tile_l2=8,
             out_dtype=jnp.bfloat16, tol=5e-2)

    print("KERNEL_OK")
</pallas_src>

<mosaic_0001>
module attributes {stable_mosaic.version = 11 : i64} {
  func.func @body(%arg0: i32, %arg1: i32, %arg2: memref<64x128xbf16, #tpu.memory_space<any>>, %arg3: memref<1x1x2x8x128xbf16, #tpu.memory_space<vmem>>, %arg4: memref<3x128x128xbf16, #tpu.memory_space<vmem>>, %arg5: memref<3x128x128xbf16, #tpu.memory_space<vmem>>, %arg6: memref<128x128xbf16, #tpu.memory_space<vmem>>, %arg7: memref<1x128xf32, #tpu.memory_space<vmem>>, %arg8: memref<1x128xf32, #tpu.memory_space<vmem>>, %arg9: memref<1x128xf32, #tpu.memory_space<vmem>>, %arg10: memref<1x128xf32, #tpu.memory_space<vmem>>, %arg11: memref<1x1x8x128xf32, #tpu.memory_space<vmem>>, %arg12: memref<1x1x8x128xf32, #tpu.memory_space<vmem>>, %arg13: memref<2x32x128xbf16, #tpu.memory_space<vmem>>, %arg14: memref<2x!tpu.dma_semaphore, #tpu.memory_space<semaphore_mem>>, %arg15: memref<24x128xf32, #tpu.memory_space<vmem>>) attributes {dimension_semantics = [#tpu.dimension_semantics<parallel>, #tpu.dimension_semantics<arbitrary>], iteration_bounds = array<i64: 2, 1>, scalar_prefetch = 0 : i64, scratch_operands = 3 : i64, tpu.core_type = #tpu.core_type<tc>, window_params = [{}, {transform_indices = @transform_1, window_bounds = array<i64: 1, 1, 2, 8, 128>}, {pipeline_mode = #tpu.pipeline_mode<synchronous>, transform_indices = @transform_2, window_bounds = array<i64: 3, 128, 128>}, {pipeline_mode = #tpu.pipeline_mode<synchronous>, transform_indices = @transform_3, window_bounds = array<i64: 3, 128, 128>}, {pipeline_mode = #tpu.pipeline_mode<synchronous>, transform_indices = @transform_4, window_bounds = array<i64: 128, 128>}, {pipeline_mode = #tpu.pipeline_mode<synchronous>, transform_indices = @transform_5, window_bounds = array<i64: 1, 128>}, {pipeline_mode = #tpu.pipeline_mode<synchronous>, transform_indices = @transform_6, window_bounds = array<i64: 1, 128>}, {pipeline_mode = #tpu.pipeline_mode<synchronous>, transform_indices = @transform_7, window_bounds = array<i64: 1, 128>}, {pipeline_mode = #tpu.pipeline_mode<synchronous>, transform_indices = @transform_8, window_bounds = array<i64: 1, 128>}, {transform_indices = @transform_9, window_bounds = array<i64: 1, 1, 8, 128>}, {transform_indices = @transform_10, window_bounds = array<i64: 1, 1, 8, 128>}]} {
    %c2_i32 = arith.constant 2 : i32
    %c0_i32 = arith.constant 0 : i32
    %0 = arith.cmpi eq, %c2_i32, %c0_i32 : i32
    %c1_i32 = arith.constant 1 : i32
    %1 = arith.select %0, %c1_i32, %c2_i32 : i32
    %2 = arith.remsi %arg1, %1 : i32
    %c0_i32_0 = arith.constant 0 : i32
    %3 = arith.cmpi ne, %2, %c0_i32_0 : i32
    %c0_i32_1 = arith.constant 0 : i32
    %4 = arith.cmpi slt, %2, %c0_i32_1 : i32
    %c0_i32_2 = arith.constant 0 : i32
    %5 = arith.cmpi slt, %1, %c0_i32_2 : i32
    %6 = arith.xori %4, %5 : i1
    %7 = arith.andi %6, %3 : i1
    %8 = arith.addi %2, %1 : i32
    %9 = arith.select %7, %8, %2 : i32
    %c0_i32_3 = arith.constant 0 : i32
    %10 = arith.cmpi eq, %arg1, %c0_i32_3 : i32
    %11 = arith.extui %10 : i1 to i32
    %c0_i32_4 = arith.constant 0 : i32
    %12 = arith.cmpi ne, %11, %c0_i32_4 : i32
    scf.if %12 {
      %c32_i32 = arith.constant 32 : i32
      %98 = arith.muli %arg0, %c32_i32 : i32
      %c0_i32_88 = arith.constant 0 : i32
      %99 = arith.addi %98, %c0_i32_88 : i32
      %c0_i32_89 = arith.constant 0 : i32
      %c0_i32_90 = arith.constant 0 : i32
      %c0_i32_91 = arith.constant 0 : i32
      %100 = tpu.memref_slice %arg2[%99, %c0_i32_91] : memref<64x128xbf16, #tpu.memory_space<any>> -> memref<32x128xbf16, #tpu.memory_space<any>>
      %c0_i32_92 = arith.constant 0 : i32
      %c0_i32_93 = arith.constant 0 : i32
      %101 = tpu.memref_slice %arg13[%c0_i32_89, %c0_i32_92, %c0_i32_93] : memref<2x32x128xbf16, #tpu.memory_space<vmem>> -> memref<1x32x128xbf16, #tpu.memory_space<vmem>>
      %102 = tpu.memref_squeeze %101 : memref<1x32x128xbf16, #tpu.memory_space<vmem>> -> memref<32x128xbf16, #tpu.memory_space<vmem>>
      %103 = tpu.memref_slice %arg14[%c0_i32_90] : memref<2x!tpu.dma_semaphore, #tpu.memory_space<semaphore_mem>> -> memref<1x!tpu.dma_semaphore, #tpu.memory_space<semaphore_mem>>
      %104 = tpu.memref_squeeze %103 : memref<1x!tpu.dma_semaphore, #tpu.memory_space<semaphore_mem>> -> memref<!tpu.dma_semaphore, #tpu.memory_space<semaphore_mem>>
      tpu.enqueue_dma source(%100 : memref<32x128xbf16, #tpu.memory_space<any>>) target(%102 : memref<32x128xbf16, #tpu.memory_space<vmem>>) target_semaphore(%104 : memref<!tpu.dma_semaphore, #tpu.memory_space<semaphore_mem>>)
    } else {
    }
    %c0_i32_5 = arith.constant 0 : i32
    %c0_i32_6 = arith.constant 0 : i32
    %13 = tpu.memref_slice %arg2[%c0_i32_5, %c0_i32_6] : memref<64x128xbf16, #tpu.memory_space<any>> -> memref<32x128xbf16, #tpu.memory_space<any>>
    %c0_i32_7 = arith.constant 0 : i32
    %c0_i32_8 = arith.constant 0 : i32
    %14 = tpu.memref_slice %arg13[%9, %c0_i32_7, %c0_i32_8] : memref<2x32x128xbf16, #tpu.memory_space<vmem>> -> memref<1x32x128xbf16, #tpu.memory_space<vmem>>
    %15 = tpu.memref_squeeze %14 : memref<1x32x128xbf16, #tpu.memory_space<vmem>> -> memref<32x128xbf16, #tpu.memory_space<vmem>>
    %16 = tpu.memref_slice %arg14[%9] : memref<2x!tpu.dma_semaphore, #tpu.memory_space<semaphore_mem>> -> memref<1x!tpu.dma_semaphore, #tpu.memory_space<semaphore_mem>>
    %17 = tpu.memref_squeeze %16 : memref<1x!tpu.dma_semaphore, #tpu.memory_space<semaphore_mem>> -> memref<!tpu.dma_semaphore, #tpu.memory_space<semaphore_mem>>
    tpu.wait_dma2 semaphore(%17 : memref<!tpu.dma_semaphore, #tpu.memory_space<semaphore_mem>>) src(%13 : memref<32x128xbf16, #tpu.memory_space<any>>) dst(%15 : memref<32x128xbf16, #tpu.memory_space<vmem>>)
    %c1_i32_9 = arith.constant 1 : i32
    %18 = arith.addi %arg1, %c1_i32_9 : i32
    %c1_i32_10 = arith.constant 1 : i32
    %19 = arith.cmpi slt, %18, %c1_i32_10 : i32
    %20 = arith.extui %19 : i1 to i32
    %c0_i32_11 = arith.constant 0 : i32
    %21 = arith.cmpi ne, %20, %c0_i32_11 : i32
    scf.if %21 {
      %c1_i32_88 = arith.constant 1 : i32
      %98 = arith.addi %arg1, %c1_i32_88 : i32
      %c1_i32_89 = arith.constant 1 : i32
      %99 = arith.subi %c1_i32_89, %9 : i32
      %c32_i32 = arith.constant 32 : i32
      %100 = arith.muli %arg0, %c32_i32 : i32
      %c16_i32_90 = arith.constant 16 : i32
      %101 = arith.muli %98, %c16_i32_90 : i32
      %102 = arith.addi %100, %101 : i32
      %c0_i32_91 = arith.constant 0 : i32
      %103 = tpu.memref_slice %arg2[%102, %c0_i32_91] : memref<64x128xbf16, #tpu.memory_space<any>> -> memref<32x128xbf16, #tpu.memory_space<any>>
      %c0_i32_92 = arith.constant 0 : i32
      %c0_i32_93 = arith.constant 0 : i32
      %104 = tpu.memref_slice %arg13[%99, %c0_i32_92, %c0_i32_93] : memref<2x32x128xbf16, #tpu.memory_space<vmem>> -> memref<1x32x128xbf16, #tpu.memory_space<vmem>>
      %105 = tpu.memref_squeeze %104 : memref<1x32x128xbf16, #tpu.memory_space<vmem>> -> memref<32x128xbf16, #tpu.memory_space<vmem>>
      %106 = tpu.memref_slice %arg14[%99] : memref<2x!tpu.dma_semaphore, #tpu.memory_space<semaphore_mem>> -> memref<1x!tpu.dma_semaphore, #tpu.memory_space<semaphore_mem>>
      %107 = tpu.memref_squeeze %106 : memref<1x!tpu.dma_semaphore, #tpu.memory_space<semaphore_mem>> -> memref<!tpu.dma_semaphore, #tpu.memory_space<semaphore_mem>>
      tpu.enqueue_dma source(%103 : memref<32x128xbf16, #tpu.memory_space<any>>) target(%105 : memref<32x128xbf16, #tpu.memory_space<vmem>>) target_semaphore(%107 : memref<!tpu.dma_semaphore, #tpu.memory_space<semaphore_mem>>)
    } else {
    }
    %c0_i32_12 = arith.constant 0 : i32
    %c0_i32_13 = arith.constant 0 : i32
    %22 = tpu.memref_slice %arg13[%9, %c0_i32_12, %c0_i32_13] : memref<2x32x128xbf16, #tpu.memory_space<vmem>> -> memref<1x32x128xbf16, #tpu.memory_space<vmem>>
    %23 = tpu.memref_squeeze %22 : memref<1x32x128xbf16, #tpu.memory_space<vmem>> -> memref<32x128xbf16, #tpu.memory_space<vmem>>
    %c0 = arith.constant 0 : index
    %c0_14 = arith.constant 0 : index
    %24 = vector.load %23[%c0, %c0_14] : memref<32x128xbf16, #tpu.memory_space<vmem>>, vector<24x128xbf16>
    %c0_15 = arith.constant 0 : index
    %c0_16 = arith.constant 0 : index
    %c0_17 = arith.constant 0 : index
    %25 = vector.load %arg4[%c0_15, %c0_16, %c0_17] : memref<3x128x128xbf16, #tpu.memory_space<vmem>>, vector<1x128x128xbf16>
    %26 = vector.shape_cast %25 : vector<1x128x128xbf16> to vector<128x128xbf16>
    %cst = arith.constant dense<0.000000e+00> : vector<24x128xf32>
    %27 = tpu.matmul %24, %26, %cst {dimension_numbers = #tpu.dot_dimension_numbers<[1], [0], [0], [1], [0, 0, 1, 1], [], []>} : vector<24x128xbf16>, vector<128x128xbf16>, vector<24x128xf32> -> vector<24x128xf32>
    %c0_i32_18 = arith.constant 0 : i32
    %c0_i32_19 = arith.constant 0 : i32
    %28 = tpu.memref_slice %arg13[%9, %c0_i32_18, %c0_i32_19] : memref<2x32x128xbf16, #tpu.memory_space<vmem>> -> memref<1x32x128xbf16, #tpu.memory_space<vmem>>
    %29 = tpu.memref_squeeze %28 : memref<1x32x128xbf16, #tpu.memory_space<vmem>> -> memref<32x128xbf16, #tpu.memory_space<vmem>>
    %c1 = arith.constant 1 : index
    %c0_20 = arith.constant 0 : index
    %30 = vector.load %29[%c1, %c0_20] : memref<32x128xbf16, #tpu.memory_space<vmem>>, vector<24x128xbf16>
    %c1_21 = arith.constant 1 : index
    %c0_22 = arith.constant 0 : index
    %c0_23 = arith.constant 0 : index
    %31 = vector.load %arg4[%c1_21, %c0_22, %c0_23] : memref<3x128x128xbf16, #tpu.memory_space<vmem>>, vector<1x128x128xbf16>
    %32 = vector.shape_cast %31 : vector<1x128x128xbf16> to vector<128x128xbf16>
    %cst_24 = arith.constant dense<0.000000e+00> : vector<24x128xf32>
    %33 = tpu.matmul %30, %32, %cst_24 {dimension_numbers = #tpu.dot_dimension_numbers<[1], [0], [0], [1], [0, 0, 1, 1], [], []>} : vector<24x128xbf16>, vector<128x128xbf16>, vector<24x128xf32> -> vector<24x128xf32>
    %34 = arith.addf %27, %33 : vector<24x128xf32>
    %c0_i32_25 = arith.constant 0 : i32
    %c0_i32_26 = arith.constant 0 : i32
    %35 = tpu.memref_slice %arg13[%9, %c0_i32_25, %c0_i32_26] : memref<2x32x128xbf16, #tpu.memory_space<vmem>> -> memref<1x32x128xbf16, #tpu.memory_space<vmem>>
    %36 = tpu.memref_squeeze %35 : memref<1x32x128xbf16, #tpu.memory_space<vmem>> -> memref<32x128xbf16, #tpu.memory_space<vmem>>
    %c2 = arith.constant 2 : index
    %c0_27 = arith.constant 0 : index
    %37 = vector.load %36[%c2, %c0_27] : memref<32x128xbf16, #tpu.memory_space<vmem>>, vector<24x128xbf16>
    %c2_28 = arith.constant 2 : index
    %c0_29 = arith.constant 0 : index
    %c0_30 = arith.constant 0 : index
    %38 = vector.load %arg4[%c2_28, %c0_29, %c0_30] : memref<3x128x128xbf16, #tpu.memory_space<vmem>>, vector<1x128x128xbf16>
    %39 = vector.shape_cast %38 : vector<1x128x128xbf16> to vector<128x128xbf16>
    %cst_31 = arith.constant dense<0.000000e+00> : vector<24x128xf32>
    %40 = tpu.matmul %37, %39, %cst_31 {dimension_numbers = #tpu.dot_dimension_numbers<[1], [0], [0], [1], [0, 0, 1, 1], [], []>} : vector<24x128xbf16>, vector<128x128xbf16>, vector<24x128xf32> -> vector<24x128xf32>
    %41 = arith.addf %34, %40 : vector<24x128xf32>
    %c0_32 = arith.constant 0 : index
    %c0_33 = arith.constant 0 : index
    %42 = vector.load %arg7[%c0_32, %c0_33] : memref<1x128xf32, #tpu.memory_space<vmem>>, vector<1x128xf32>
    %43 = vector.broadcast %42 : vector<1x128xf32> to vector<24x128xf32>
    %44 = arith.mulf %41, %43 : vector<24x128xf32>
    %c0_34 = arith.constant 0 : index
    %c0_35 = arith.constant 0 : index
    %45 = vector.load %arg8[%c0_34, %c0_35] : memref<1x128xf32, #tpu.memory_space<vmem>>, vector<1x128xf32>
    %46 = vector.broadcast %45 : vector<1x128xf32> to vector<24x128xf32>
    %47 = arith.addf %44, %46 : vector<24x128xf32>
    %cst_36 = arith.constant 0.000000e+00 : f32
    %48 = vector.broadcast %cst_36 : f32 to vector<24x128xf32>
    %49 = arith.maximumf %47, %48 : vector<24x128xf32>
    %c0_37 = arith.constant 0 : index
    %c0_38 = arith.constant 0 : index
    %50 = vector.load %arg15[%c0_37, %c0_38] : memref<24x128xf32, #tpu.memory_space<vmem>>, vector<24x128xf32>
    tpu.vector_store %arg15[%c0_37, %c0_38], %49 {strides = array<i32>} : memref<24x128xf32, #tpu.memory_space<vmem>>, vector<24x128xf32>,
    %c16_i32 = arith.constant 16 : i32
    %51 = arith.muli %arg1, %c16_i32 : i32
    %c1_i32_39 = arith.constant 1 : i32
    %52 = arith.cmpi slt, %51, %c1_i32_39 : i32
    %c16_i32_40 = arith.constant 16 : i32
    %53 = arith.muli %arg1, %c16_i32_40 : i32
    %c16_i32_41 = arith.constant 16 : i32
    %54 = arith.addi %53, %c16_i32_41 : i32
    %c16_i32_42 = arith.constant 16 : i32
    %55 = arith.cmpi sgt, %54, %c16_i32_42 : i32
    %56 = arith.ori %52, %55 : i1
    %57 = arith.extui %56 : i1 to i32
    %c0_i32_43 = arith.constant 0 : i32
    %58 = arith.cmpi ne, %57, %c0_i32_43 : i32
    scf.if %58 {
      %c16_i32_88 = arith.constant 16 : i32
      %98 = arith.muli %arg1, %c16_i32_88 : i32
      %c1_i32_89 = arith.constant 1 : i32
      %99 = arith.subi %98, %c1_i32_89 : i32
      %100 = tpu.iota {dimensions = array<i32: 0>} : vector<24x1xi32>
      %101 = vector.broadcast %99 : i32 to vector<24x1xi32>
      %102 = arith.addi %101, %100 : vector<24x1xi32>
      %c0_i32_90 = arith.constant 0 : i32
      %103 = vector.broadcast %c0_i32_90 : i32 to vector<24x1xi32>
      %104 = arith.cmpi sge, %102, %103 : vector<24x1xi32>
      %c16_i32_91 = arith.constant 16 : i32
      %105 = vector.broadcast %c16_i32_91 : i32 to vector<24x1xi32>
      %106 = arith.cmpi slt, %102, %105 : vector<24x1xi32>
      %107 = arith.andi %104, %106 : vector<24x1xi1>
      %c0_92 = arith.constant 0 : index
      %c0_93 = arith.constant 0 : index
      %108 = vector.load %arg15[%c0_92, %c0_93] : memref<24x128xf32, #tpu.memory_space<vmem>>, vector<24x128xf32>
      %109 = arith.extui %107 : vector<24x1xi1> to vector<24x1xi32>
      %110 = arith.sitofp %109 : vector<24x1xi32> to vector<24x1xf32>
      %111 = vector.broadcast %110 : vector<24x1xf32> to vector<24x128xf32>
      %112 = arith.mulf %108, %111 : vector<24x128xf32>
      %c0_94 = arith.constant 0 : index
      %c0_95 = arith.constant 0 : index
      %113 = vector.load %arg15[%c0_94, %c0_95] : memref<24x128xf32, #tpu.memory_space<vmem>>, vector<24x128xf32>
      tpu.vector_store %arg15[%c0_94, %c0_95], %112 {strides = array<i32>} : memref<24x128xf32, #tpu.memory_space<vmem>>, vector<24x128xf32>,
    } else {
    }
    %c0_44 = arith.constant 0 : index
    %c0_45 = arith.constant 0 : index
    %c0_46 = arith.constant 0 : index
    %c0_47 = arith.constant 0 : index
    %c0_48 = arith.constant 0 : index
    %59 = vector.load %arg3[%c0_44, %c0_45, %c0_46, %c0_47, %c0_48] : memref<1x1x2x8x128xbf16, #tpu.memory_space<vmem>>, vector<1x1x1x8x128xbf16>
    %60 = vector.shape_cast %59 : vector<1x1x1x8x128xbf16> to vector<8x128xbf16>
    %c0_49 = arith.constant 0 : index
    %c0_50 = arith.constant 0 : index
    %c1_51 = arith.constant 1 : index
    %c0_52 = arith.constant 0 : index
    %c0_53 = arith.constant 0 : index
    %61 = vector.load %arg3[%c0_49, %c0_50, %c1_51, %c0_52, %c0_53] : memref<1x1x2x8x128xbf16, #tpu.memory_space<vmem>>, vector<1x1x1x8x128xbf16>
    %62 = vector.shape_cast %61 : vector<1x1x1x8x128xbf16> to vector<8x128xbf16>
    %63 = arith.maximumf %60, %62 : vector<8x128xbf16>
    %c0_54 = arith.constant 0 : index
    %c0_55 = arith.constant 0 : index
    %64 = vector.load %arg6[%c0_54, %c0_55] : memref<128x128xbf16, #tpu.memory_space<vmem>>, vector<128x128xbf16>
    %cst_56 = arith.constant dense<0.000000e+00> : vector<8x128xf32>
    %65 = tpu.matmul %63, %64, %cst_56 {dimension_numbers = #tpu.dot_dimension_numbers<[1], [0], [0], [1], [0, 0, 1, 1], [], []>} : vector<8x128xbf16>, vector<128x128xbf16>, vector<8x128xf32> -> vector<8x128xf32>
    %c0_57 = arith.constant 0 : index
    %c0_58 = arith.constant 0 : index
    %66 = tpu.strided_load %arg15[%c0_57, %c0_58] {strides = array<i32: 2, 1>} : memref<24x128xf32, #tpu.memory_space<vmem>>, vector<8x128xf32>
    %67 = arith.truncf %66 : vector<8x128xf32> to vector<8x128xbf16>
    %c0_59 = arith.constant 0 : index
    %c0_60 = arith.constant 0 : index
    %c0_61 = arith.constant 0 : index
    %68 = vector.load %arg5[%c0_59, %c0_60, %c0_61] : memref<3x128x128xbf16, #tpu.memory_space<vmem>>, vector<1x128x128xbf16>
    %69 = vector.shape_cast %68 : vector<1x128x128xbf16> to vector<128x128xbf16>
    %cst_62 = arith.constant dense<0.000000e+00> : vector<8x128xf32>
    %70 = tpu.matmul %67, %69, %cst_62 {dimension_numbers = #tpu.dot_dimension_numbers<[1], [0], [0], [1], [0, 0, 1, 1], [], []>} : vector<8x128xbf16>, vector<128x128xbf16>, vector<8x128xf32> -> vector<8x128xf32>
    %71 = arith.addf %65, %70 : vector<8x128xf32>
    %c1_63 = arith.constant 1 : index
    %c0_64 = arith.constant 0 : index
    %72 = tpu.strided_load %arg15[%c1_63, %c0_64] {strides = array<i32: 2, 1>} : memref<24x128xf32, #tpu.memory_space<vmem>>, vector<8x128xf32>
    %73 = arith.truncf %72 : vector<8x128xf32> to vector<8x128xbf16>
    %c1_65 = arith.constant 1 : index
    %c0_66 = arith.constant 0 : index
    %c0_67 = arith.constant 0 : index
    %74 = vector.load %arg5[%c1_65, %c0_66, %c0_67] : memref<3x128x128xbf16, #tpu.memory_space<vmem>>, vector<1x128x128xbf16>
    %75 = vector.shape_cast %74 : vector<1x128x128xbf16> to vector<128x128xbf16>
    %cst_68 = arith.constant dense<0.000000e+00> : vector<8x128xf32>
    %76 = tpu.matmul %73, %75, %cst_68 {dimension_numbers = #tpu.dot_dimension_numbers<[1], [0], [0], [1], [0, 0, 1, 1], [], []>} : vector<8x128xbf16>, vector<128x128xbf16>, vector<8x128xf32> -> vector<8x128xf32>
    %77 = arith.addf %71, %76 : vector<8x128xf32>
    %c2_69 = arith.constant 2 : index
    %c0_70 = arith.constant 0 : index
    %78 = tpu.strided_load %arg15[%c2_69, %c0_70] {strides = array<i32: 2, 1>} : memref<24x128xf32, #tpu.memory_space<vmem>>, vector<8x128xf32>
    %79 = arith.truncf %78 : vector<8x128xf32> to vector<8x128xbf16>
    %c2_71 = arith.constant 2 : index
    %c0_72 = arith.constant 0 : index
    %c0_73 = arith.constant 0 : index
    %80 = vector.load %arg5[%c2_71, %c0_72, %c0_73] : memref<3x128x128xbf16, #tpu.memory_space<vmem>>, vector<1x128x128xbf16>
    %81 = vector.shape_cast %80 : vector<1x128x128xbf16> to vector<128x128xbf16>
    %cst_74 = arith.constant dense<0.000000e+00> : vector<8x128xf32>
    %82 = tpu.matmul %79, %81, %cst_74 {dimension_numbers = #tpu.dot_dimension_numbers<[1], [0], [0], [1], [0, 0, 1, 1], [], []>} : vector<8x128xbf16>, vector<128x128xbf16>, vector<8x128xf32> -> vector<8x128xf32>
    %83 = arith.addf %77, %82 : vector<8x128xf32>
    %c0_75 = arith.constant 0 : index
    %c0_76 = arith.constant 0 : index
    %c0_77 = arith.constant 0 : index
    %c0_78 = arith.constant 0 : index
    %84 = vector.load %arg12[%c0_75, %c0_76, %c0_77, %c0_78] : memref<1x1x8x128xf32, #tpu.memory_space<vmem>>, vector<1x1x8x128xf32>
    %85 = vector.shape_cast %84 : vector<1x1x8x128xf32> to vector<8x128xf32>
    %86 = vector.shape_cast %83 : vector<8x128xf32> to vector<1x1x8x128xf32>
    tpu.vector_store %arg12[%c0_75, %c0_76, %c0_77, %c0_78], %86 {strides = array<i32>} : memref<1x1x8x128xf32, #tpu.memory_space<vmem>>, vector<1x1x8x128xf32>,
    %c0_79 = arith.constant 0 : index
    %c0_80 = arith.constant 0 : index
    %87 = vector.load %arg9[%c0_79, %c0_80] : memref<1x128xf32, #tpu.memory_space<vmem>>, vector<1x128xf32>
    %88 = vector.broadcast %87 : vector<1x128xf32> to vector<8x128xf32>
    %89 = arith.mulf %83, %88 : vector<8x128xf32>
    %c0_81 = arith.constant 0 : index
    %c0_82 = arith.constant 0 : index
    %90 = vector.load %arg10[%c0_81, %c0_82] : memref<1x128xf32, #tpu.memory_space<vmem>>, vector<1x128xf32>
    %91 = vector.broadcast %90 : vector<1x128xf32> to vector<8x128xf32>
    %92 = arith.addf %89, %91 : vector<8x128xf32>
    %cst_83 = arith.constant 0.000000e+00 : f32
    %93 = vector.broadcast %cst_83 : f32 to vector<8x128xf32>
    %94 = arith.maximumf %92, %93 : vector<8x128xf32>
    %c0_84 = arith.constant 0 : index
    %c0_85 = arith.constant 0 : index
    %c0_86 = arith.constant 0 : index
    %c0_87 = arith.constant 0 : index
    %95 = vector.load %arg11[%c0_84, %c0_85, %c0_86, %c0_87] : memref<1x1x8x128xf32, #tpu.memory_space<vmem>>, vector<1x1x8x128xf32>
    %96 = vector.shape_cast %95 : vector<1x1x8x128xf32> to vector<8x128xf32>
    %97 = vector.shape_cast %94 : vector<8x128xf32> to vector<1x1x8x128xf32>
    tpu.vector_store %arg11[%c0_84, %c0_85, %c0_86, %c0_87], %97 {strides = array<i32>} : memref<1x1x8x128xf32, #tpu.memory_space<vmem>>, vector<1x1x8x128xf32>,
    return
  }
  func.func @transform_1(%arg0: i32, %arg1: i32) -> (i32, i32, i32, i32, i32) {
    %c0_i32 = arith.constant 0 : i32
    %c0_i32_0 = arith.constant 0 : i32
    %c0_i32_1 = arith.constant 0 : i32
    %c0_i32_2 = arith.constant 0 : i32
    return %arg0, %arg1, %c0_i32, %c0_i32_0, %c0_i32_1 : i32, i32, i32, i32, i32
  }
  func.func @transform_2(%arg0: i32, %arg1: i32) -> (i32, i32, i32) {
    %c0_i32 = arith.constant 0 : i32
    %c0_i32_0 = arith.constant 0 : i32
    %c0_i32_1 = arith.constant 0 : i32
    %c0_i32_2 = arith.constant 0 : i32
    return %c0_i32, %c0_i32_0, %c0_i32_1 : i32, i32, i32
  }
  func.func @transform_3(%arg0: i32, %arg1: i32) -> (i32, i32, i32) {
    %c0_i32 = arith.constant 0 : i32
    %c0_i32_0 = arith.constant 0 : i32
    %c0_i32_1 = arith.constant 0 : i32
    %c0_i32_2 = arith.constant 0 : i32
    return %c0_i32, %c0_i32_0, %c0_i32_1 : i32, i32, i32
  }
  func.func @transform_4(%arg0: i32, %arg1: i32) -> (i32, i32) {
    %c0_i32 = arith.constant 0 : i32
    %c0_i32_0 = arith.constant 0 : i32
    %c0_i32_1 = arith.constant 0 : i32
    return %c0_i32, %c0_i32_0 : i32, i32
  }
  func.func @transform_5(%arg0: i32, %arg1: i32) -> (i32, i32) {
    %c0_i32 = arith.constant 0 : i32
    %c0_i32_0 = arith.constant 0 : i32
    %c0_i32_1 = arith.constant 0 : i32
    return %c0_i32, %c0_i32_0 : i32, i32
  }
  func.func @transform_6(%arg0: i32, %arg1: i32) -> (i32, i32) {
    %c0_i32 = arith.constant 0 : i32
    %c0_i32_0 = arith.constant 0 : i32
    %c0_i32_1 = arith.constant 0 : i32
    return %c0_i32, %c0_i32_0 : i32, i32
  }
  func.func @transform_7(%arg0: i32, %arg1: i32) -> (i32, i32) {
    %c0_i32 = arith.constant 0 : i32
    %c0_i32_0 = arith.constant 0 : i32
    %c0_i32_1 = arith.constant 0 : i32
    return %c0_i32, %c0_i32_0 : i32, i32
  }
  func.func @transform_8(%arg0: i32, %arg1: i32) -> (i32, i32) {
    %c0_i32 = arith.constant 0 : i32
    %c0_i32_0 = arith.constant 0 : i32
    %c0_i32_1 = arith.constant 0 : i32
    return %c0_i32, %c0_i32_0 : i32, i32
  }
  func.func @transform_9(%arg0: i32, %arg1: i32) -> (i32, i32, i32, i32) {
    %c0_i32 = arith.constant 0 : i32
    %c0_i32_0 = arith.constant 0 : i32
    %c0_i32_1 = arith.constant 0 : i32
    return %arg0, %arg1, %c0_i32, %c0_i32_0 : i32, i32, i32, i32
  }
  func.func @transform_10(%arg0: i32, %arg1: i32) -> (i32, i32, i32, i32) {
    %c0_i32 = arith.constant 0 : i32
    %c0_i32_0 = arith.constant 0 : i32
    %c0_i32_1 = arith.constant 0 : i32
    return %arg0, %arg1, %c0_i32, %c0_i32_0 : i32, i32, i32, i32
  }
}

</mosaic_0001>

<llo_original>
// kernel: tpu_custom_call.1
$region0: #{tpu_custom_call.1}
  #allocation0 [shape = 'u32[]', space=smem, size = 0x4, offset = 0x4, fixed_abs, tag = 'smem constant byte address 0x4 - core index']
  #allocation1 [shape = 'u32[144,128]{1,0:T(1,128)}', space=vmem, size = 0x12000, scoped, tag = 'internal scratch']
  #allocation2 [shape = 'bf16[2,32,128]{2,1,0:T(16,128)(2,1)}', space=vmem, size = 0x4000, scoped, tag = 'scratch operand']
  #allocation3 [shape = 's32[2]{0}', space=sflag, size = 0x8, scoped, tag = 'scratch operand']
  #allocation4 [shape = 'f32[24,128]{1,0:T(8,128)}', space=vmem, size = 0x3000, scoped, tag = 'scratch operand']
  #allocation16 [shape = 's32[]', space=sflag, size = 0x4, offset = 0, fixed_abs, tag = 'sflag constant byte address 0x0 - dummy sync flag']
  #allocation17 [shape = 's32[]', space=sflag, size = 0x4, offset = 0, fixed_abs, tag = 'sflag constant byte address 0x0 - dummy sync flag']
  #allocation18 [shape = 'u32[]', space=smem, size = 0x4, offset = 0x44, fixed_abs, tag = 'smem constant byte address 0x44 - assertion arg 0']
  #allocation19 [shape = 'u32[]', space=smem, size = 0x4, offset = 0x48, fixed_abs, tag = 'smem constant byte address 0x48 - assertion arg 1']
  #allocation20 [shape = 's32[]', space=sflag, size = 0x4, offset = 0, fixed_abs, tag = 'sflag constant byte address 0x0 - dummy sync flag']
  #allocation21 [shape = 's32[]', space=sflag, size = 0x4, offset = 0, fixed_abs, tag = 'sflag constant byte address 0x0 - dummy sync flag']
  %s0 = inlined_call_operand.hbm [shape: bf16[64,128], index: 0, kind: input, shape index: {}]
  %s1 = inlined_call_operand.hbm [shape: bf16[2,1,2,8,128], index: 1, kind: input, shape index: {}]
  %s2 = inlined_call_operand.hbm [shape: bf16[3,128,128], index: 2, kind: input, shape index: {}]
  %s3 = inlined_call_operand.hbm [shape: bf16[3,128,128], index: 3, kind: input, shape index: {}]
  %s4 = inlined_call_operand.hbm [shape: bf16[128,128], index: 4, kind: input, shape index: {}]
  %s5 = inlined_call_operand.vmem [shape: f32[1,128], index: 5, kind: input, shape index: {}]
  %s6 = inlined_call_operand.vmem [shape: f32[1,128], index: 6, kind: input, shape index: {}]
  %s7 = inlined_call_operand.vmem [shape: f32[1,128], index: 7, kind: input, shape index: {}]
  %s8 = inlined_call_operand.vmem [shape: f32[1,128], index: 8, kind: input, shape index: {}]
  %s9 = inlined_call_operand.hbm [shape: f32[2,1,8,128], index: 9, kind: output, shape index: {0}]
  %s10 = inlined_call_operand.hbm [shape: f32[2,1,8,128], index: 10, kind: output, shape index: {1}]
  %11 = xla_tuple %s9, %s10
  %s12 = sld [smem:[#allocation0]]
  $region109: #{tpu_custom_call.1} parent=0
    _
  %s14 = ssub.s32 1, %s12
  %s15 = scalar_select 0, %s14, %s12
  $region1: #{tpu_custom_call.1} parent=0
    #allocation5 [shape = 'u8[8192]{0}', space=vmem, size = 0x2000, scoped, tag = 'input window, operand 1']
    #allocation6 [shape = 's32[2]{0}', space=sflag, size = 0x8, scoped, tag = 'scoped memory for tpu_custom_call.1']
    #allocation7 [shape = 's32[2]{0}', space=sflag, size = 0x8, scoped, tag = 'scoped memory for tpu_custom_call.1']
    #allocation8 [shape = 'u8[98304]{0}', space=vmem, size = 0x18000, scoped, tag = 'input window, operand 2, single buffered']
    #allocation9 [shape = 's32[1]{0}', space=sflag, size = 0x4, scoped, tag = 'scoped memory for tpu_custom_call.1']
    #allocation10 [shape = 'u8[98304]{0}', space=vmem, size = 0x18000, scoped, tag = 'input window, operand 3, single buffered']
    #allocation11 [shape = 'u8[32768]{0}', space=vmem, size = 0x8000, scoped, tag = 'input window, operand 4, single buffered']
    #allocation12 [shape = 's32[1]{0}', space=sflag, size = 0x4, scoped, tag = 'scoped memory for tpu_custom_call.1']
    #allocation13 [shape = 'u8[8192]{0}', space=vmem, size = 0x2000, scoped, tag = 'output window, operand 0']
    #allocation14 [shape = 'u8[8192]{0}', space=vmem, size = 0x2000, scoped, tag = 'output window, operand 1']
    #allocation15 [shape = 's32[2]{0}', space=sflag, size = 0x8, scoped, tag = 'scoped memory for tpu_custom_call.1']
    %16 = vsyncpa [#allocation6], 0
    %s17 = scalar_lea.sflag [#allocation6], 1
    %18 = vsyncpa %s17, 0
    %19 = vsyncpa [#allocation9], 0
    %20 = vsyncpa [#allocation12], 0
    %21 = vsyncpa [#allocation7], 0
    %s22 = scalar_lea.sflag [#allocation7], 1
    %23 = vsyncpa %s22, 0
    %24 = vsyncpa [#allocation15], 0
    %s25 = scalar_lea.sflag [#allocation15], 1
    %26 = vsyncpa %s25, 0
    loop: start=0, step=1, limit=4
    $region2: #{tpu_custom_call.1} parent=1 // loop_pre_header
      _
    $region3: #{tpu_custom_call.1} parent=1 // loop_header
      %s28 = sphi 0, %s32
      %p29 = scmp.ge.s32.totalorder %s28, 4
      %s35 = sphi 0, %s47
      %s36 = sphi 0, %s43
      %s37 = sphi 0, %s35
      %s38 = sphi 0, %s36
      %s39 = sphi 0, %s37
      %s40 = sphi 0, %s38
      %s52 = sphi 0, %s54
      %s55 = sphi 0, %s52
      %s56 = sphi 0, %s55
      %s72 = sphi 0, %s56
      %s76 = sphi 0, %s76
      %s78 = sphi 0, %s76
      %s79 = sphi 0, %s78
      %s93 = sphi 0, %s79
      %s97 = sphi 0, %s97
      %s99 = sphi 0, %s97
      %s100 = sphi 0, %s99
      %s114 = sphi 0, %s100
      %s118 = sphi 0, %s118
      %s120 = sphi 0, %s118
      %s121 = sphi 0, %s120
      %s135 = sphi 0, %s121
      %s139 = sphi 0, %s139
      %s141 = sphi 0, %s139
      %s142 = sphi 0, %s141
      %s156 = sphi 0, %s142
      %s160 = sphi 0, %s160
      %s162 = sphi 0, %s160
      %s163 = sphi 0, %s162
      %s177 = sphi 0, %s163
      %s181 = sphi 0, %s181
      %s183 = sphi 0, %s181
      %s184 = sphi 0, %s183
      %s198 = sphi 0, %s184
      %s202 = sphi 0, %s202
      %s204 = sphi 0, %s202
      %s205 = sphi 0, %s204
      %s219 = sphi 0, %s205
      %s227 = sphi 0, %s229
      %s230 = sphi 0, %s227
      %s231 = sphi 0, %s230
      %s247 = sphi 0, %s231
      %s255 = sphi 0, %s257
      %s258 = sphi 0, %s255
      %s259 = sphi 0, %s258
      %s275 = sphi 0, %s259
    $region4: #{tpu_custom_call.1} parent=1 // loop_header_branch
      %31 = sbr.rel (%p29) target = $region8
    $region5: #{tpu_custom_call.1} parent=1 // loop_body
      %s33 = ssub.s32 %s28, 1
      %s34 = ssub.s32 %s28, 2
      %s41 = sadd.s32 1, %s36
      %p42 = scmp.ge.s32.totalorder %s41, 1
      %s43 = scalar_select %p42, 0, %s41
      %s44 = sadd.s32 1, %s35
      %s45 = scalar_select %p42, %s44, %s35
      %p46 = scmp.ge.s32.totalorder %s45, 2
      %s47 = scalar_select %p46, 0, %s45
      %s48 = ssub.s32 %s35, %s47
      %s49 = ssub.s32 %s36, %s43
      %s50 = sor.u32 %s48, %s49
      %p51 = scmp.eq.s32.totalorder %s50, 0
      %s53 = sadd.s32 %s52, 1
      %s54 = scalar_select %p51, %s52, %s53
      %p57 = pneg %p51
      %p58 = scmp.eq.s32.totalorder %s28, 1
      %p59 = por %p57, %p58
      %p60 = scmp.ne.s32.totalorder %s52, %s55
      %p61 = scmp.eq.s32.totalorder %s28, 0
      %p62 = por %p60, %p61
      %p63 = scmp.ne.s32.totalorder %s52, %s55
      %p64 = scmp.eq.s32.totalorder %s33, 1
      %p65 = por %p63, %p64
      %p66 = scmp.ne.s32.totalorder %s55, %s56
      %p67 = scmp.eq.s32.totalorder %s33, 0
      %p68 = por %p66, %p67
      %p69 = scmp.ne.s32.totalorder %s55, %s56
      %p70 = scmp.eq.s32.totalorder %s34, 1
      %p71 = por %p69, %p70
      %p73 = scmp.ne.s32.totalorder %s56, %s72
      %p74 = scmp.eq.s32.totalorder %s34, 0
      %p75 = por %p73, %p74
      %s77 = sadd.s32 %s76, 1
      %p80 = scmp.eq.s32.totalorder %s28, 1
      %p81 = scmp.ne.s32.totalorder %s76, %s78
      %p82 = scmp.eq.s32.totalorder %s28, 0
      %p83 = por %p81, %p82
      %p84 = scmp.ne.s32.totalorder %s76, %s78
      %p85 = scmp.eq.s32.totalorder %s33, 1
      %p86 = por %p84, %p85
      %p87 = scmp.ne.s32.totalorder %s78, %s79
      %p88 = scmp.eq.s32.totalorder %s33, 0
      %p89 = por %p87, %p88
      %p90 = scmp.ne.s32.totalorder %s78, %s79
      %p91 = scmp.eq.s32.totalorder %s34, 1
      %p92 = por %p90, %p91
      %p94 = scmp.ne.s32.totalorder %s79, %s93
      %p95 = scmp.eq.s32.totalorder %s34, 0
      %p96 = por %p94, %p95
      %s98 = sadd.s32 %s97, 1
      %p101 = scmp.eq.s32.totalorder %s28, 1
      %p102 = scmp.ne.s32.totalorder %s97, %s99
      %p103 = scmp.eq.s32.totalorder %s28, 0
      %p104 = por %p102, %p103
      %p105 = scmp.ne.s32.totalorder %s97, %s99
      %p106 = scmp.eq.s32.totalorder %s33, 1
      %p107 = por %p105, %p106
      %p108 = scmp.ne.s32.totalorder %s99, %s100
      %p109 = scmp.eq.s32.totalorder %s33, 0
      %p110 = por %p108, %p109
      %p111 = scmp.ne.s32.totalorder %s99, %s100
      %p112 = scmp.eq.s32.totalorder %s34, 1
      %p113 = por %p111, %p112
      %p115 = scmp.ne.s32.totalorder %s100, %s114
      %p116 = scmp.eq.s32.totalorder %s34, 0
      %p117 = por %p115, %p116
      %s119 = sadd.s32 %s118, 1
      %p122 = scmp.eq.s32.totalorder %s28, 1
      %p123 = scmp.ne.s32.totalorder %s118, %s120
      %p124 = scmp.eq.s32.totalorder %s28, 0
      %p125 = por %p123, %p124
      %p126 = scmp.ne.s32.totalorder %s118, %s120
      %p127 = scmp.eq.s32.totalorder %s33, 1
      %p128 = por %p126, %p127
      %p129 = scmp.ne.s32.totalorder %s120, %s121
      %p130 = scmp.eq.s32.totalorder %s33, 0
      %p131 = por %p129, %p130
      %p132 = scmp.ne.s32.totalorder %s120, %s121
      %p133 = scmp.eq.s32.totalorder %s34, 1
      %p134 = por %p132, %p133
      %p136 = scmp.ne.s32.totalorder %s121, %s135
      %p137 = scmp.eq.s32.totalorder %s34, 0
      %p138 = por %p136, %p137
      %s140 = sadd.s32 %s139, 1
      %p143 = scmp.eq.s32.totalorder %s28, 1
      %p144 = scmp.ne.s32.totalorder %s139, %s141
      %p145 = scmp.eq.s32.totalorder %s28, 0
      %p146 = por %p144, %p145
      %p147 = scmp.ne.s32.totalorder %s139, %s141
      %p148 = scmp.eq.s32.totalorder %s33, 1
      %p149 = por %p147, %p148
      %p150 = scmp.ne.s32.totalorder %s141, %s142
      %p151 = scmp.eq.s32.totalorder %s33, 0
      %p152 = por %p150, %p151
      %p153 = scmp.ne.s32.totalorder %s141, %s142
      %p154 = scmp.eq.s32.totalorder %s34, 1
      %p155 = por %p153, %p154
      %p157 = scmp.ne.s32.totalorder %s142, %s156
      %p158 = scmp.eq.s32.totalorder %s34, 0
      %p159 = por %p157, %p158
      %s161 = sadd.s32 %s160, 1
      %p164 = scmp.eq.s32.totalorder %s28, 1
      %p165 = scmp.ne.s32.totalorder %s160, %s162
      %p166 = scmp.eq.s32.totalorder %s28, 0
      %p167 = por %p165, %p166
      %p168 = scmp.ne.s32.totalorder %s160, %s162
      %p169 = scmp.eq.s32.totalorder %s33, 1
      %p170 = por %p168, %p169
      %p171 = scmp.ne.s32.totalorder %s162, %s163
      %p172 = scmp.eq.s32.totalorder %s33, 0
      %p173 = por %p171, %p172
      %p174 = scmp.ne.s32.totalorder %s162, %s163
      %p175 = scmp.eq.s32.totalorder %s34, 1
      %p176 = por %p174, %p175
      %p178 = scmp.ne.s32.totalorder %s163, %s177
      %p179 = scmp.eq.s32.totalorder %s34, 0
      %p180 = por %p178, %p179
      %s182 = sadd.s32 %s181, 1
      %p185 = scmp.eq.s32.totalorder %s28, 1
      %p186 = scmp.ne.s32.totalorder %s181, %s183
      %p187 = scmp.eq.s32.totalorder %s28, 0
      %p188 = por %p186, %p187
      %p189 = scmp.ne.s32.totalorder %s181, %s183
      %p190 = scmp.eq.s32.totalorder %s33, 1
      %p191 = por %p189, %p190
      %p192 = scmp.ne.s32.totalorder %s183, %s184
      %p193 = scmp.eq.s32.totalorder %s33, 0
      %p194 = por %p192, %p193
      %p195 = scmp.ne.s32.totalorder %s183, %s184
      %p196 = scmp.eq.s32.totalorder %s34, 1
      %p197 = por %p195, %p196
      %p199 = scmp.ne.s32.totalorder %s184, %s198
      %p200 = scmp.eq.s32.totalorder %s34, 0
      %p201 = por %p199, %p200
      %s203 = sadd.s32 %s202, 1
      %p206 = scmp.eq.s32.totalorder %s28, 1
      %p207 = scmp.ne.s32.totalorder %s202, %s204
      %p208 = scmp.eq.s32.totalorder %s28, 0
      %p209 = por %p207, %p208
      %p210 = scmp.ne.s32.totalorder %s202, %s204
      %p211 = scmp.eq.s32.totalorder %s33, 1
      %p212 = por %p210, %p211
      %p213 = scmp.ne.s32.totalorder %s204, %s205
      %p214 = scmp.eq.s32.totalorder %s33, 0
      %p215 = por %p213, %p214
      %p216 = scmp.ne.s32.totalorder %s204, %s205
      %p217 = scmp.eq.s32.totalorder %s34, 1
      %p218 = por %p216, %p217
      %p220 = scmp.ne.s32.totalorder %s205, %s219
      %p221 = scmp.eq.s32.totalorder %s34, 0
      %p222 = por %p220, %p221
      %s223 = ssub.s32 %s35, %s47
      %s224 = ssub.s32 %s36, %s43
      %s225 = sor.u32 %s223, %s224
      %p226 = scmp.eq.s32.totalorder %s225, 0
      %s228 = sadd.s32 %s227, 1
      %s229 = scalar_select %p226, %s227, %s228
      %p232 = pneg %p226
      %p233 = scmp.eq.s32.totalorder %s28, 1
      %p234 = por %p232, %p233
      %p235 = scmp.ne.s32.totalorder %s227, %s230
      %p236 = scmp.eq.s32.totalorder %s28, 0
      %p237 = por %p235, %p236
      %p238 = scmp.ne.s32.totalorder %s227, %s230
      %p239 = scmp.eq.s32.totalorder %s33, 1
      %p240 = por %p238, %p239
      %p241 = scmp.ne.s32.totalorder %s230, %s231
      %p242 = scmp.eq.s32.totalorder %s33, 0
      %p243 = por %p241, %p242
      %p244 = scmp.ne.s32.totalorder %s230, %s231
      %p245 = scmp.eq.s32.totalorder %s34, 1
      %p246 = por %p244, %p245
      %p248 = scmp.ne.s32.totalorder %s231, %s247
      %p249 = scmp.eq.s32.totalorder %s34, 0
      %p250 = por %p248, %p249
      %s251 = ssub.s32 %s35, %s47
      %s252 = ssub.s32 %s36, %s43
      %s253 = sor.u32 %s251, %s252
      %p254 = scmp.eq.s32.totalorder %s253, 0
      %s256 = sadd.s32 %s255, 1
      %s257 = scalar_select %p254, %s255, %s256
      %p260 = pneg %p254
      %p261 = scmp.eq.s32.totalorder %s28, 1
      %p262 = por %p260, %p261
      %p263 = scmp.ne.s32.totalorder %s255, %s258
      %p264 = scmp.eq.s32.totalorder %s28, 0
      %p265 = por %p263, %p264
      %p266 = scmp.ne.s32.totalorder %s255, %s258
      %p267 = scmp.eq.s32.totalorder %s33, 1
      %p268 = por %p266, %p267
      %p269 = scmp.ne.s32.totalorder %s258, %s259
      %p270 = scmp.eq.s32.totalorder %s33, 0
      %p271 = por %p269, %p270
      %p272 = scmp.ne.s32.totalorder %s258, %s259
      %p273 = scmp.eq.s32.totalorder %s34, 1
      %p274 = por %p272, %p273
      %p276 = scmp.ne.s32.totalorder %s259, %s275
      %p277 = scmp.eq.s32.totalorder %s34, 0
      %p278 = por %p276, %p277
      %p279 = scmp.le.s32.totalorder 1, %s28
      %p280 = scmp.lt.s32.totalorder %s28, 3
      %p281 = pnand %p279, %p280
      %p282 = pneg %p281
      // Predicated region
      $region9: #{tpu_custom_call.1} parent=5 // pred_check
        _
      $region10: #{tpu_custom_call.1} parent=5 // pred_check_branch
        %284 = sbr.rel (%p281) target = $region12
      $region11: #{tpu_custom_call.1} parent=5 // pred_region
        %s285 = ssub.s32 %s28, 1
        // Predicated region
        $region13: #{tpu_custom_call.1} parent=11 // pred_check
          %p286 = pneg %p89
        $region14: #{tpu_custom_call.1} parent=11 // pred_check_branch
          %288 = sbr.rel (%p286) target = $region16
        $region15: #{tpu_custom_call.1} parent=11 // pred_region
          %s290 = ssub.s32 3072, 3072
          %291 = vsyncadd [#allocation9], %s290
          %s292 = sshll.u32 [#allocation8], 4
          %s293 = int_to_ptr.vmem [resolvable:$true] %s292
          %298 = dma.hbm_to_vmem [thread:$0]  %s2, 3072, %s293, [#allocation9], 64, 64, 4
        $region16: #{tpu_custom_call.1} parent=11 // pred_fallthru
          _
        // Predicated region
        $region17: #{tpu_custom_call.1} parent=11 // pred_check
          %p299 = pneg %p110
        $region18: #{tpu_custom_call.1} parent=11 // pred_check_branch
          %301 = sbr.rel (%p299) target = $region20
        $region19: #{tpu_custom_call.1} parent=11 // pred_region
          %s303 = ssub.s32 3072, 3072
          %304 = vsyncadd [#allocation9], %s303
          %s305 = sshll.u32 [#allocation10], 4
          %s306 = int_to_ptr.vmem [resolvable:$true] %s305
          %311 = dma.hbm_to_vmem [thread:$0]  %s3, 3072, %s306, [#allocation9], 64, 64, 4
        $region20: #{tpu_custom_call.1} parent=11 // pred_fallthru
          _
        // Predicated region
        $region21: #{tpu_custom_call.1} parent=11 // pred_check
          %p312 = pneg %p131
        $region22: #{tpu_custom_call.1} parent=11 // pred_check_branch
          %314 = sbr.rel (%p312) target = $region24
        $region23: #{tpu_custom_call.1} parent=11 // pred_region
          %s316 = ssub.s32 1024, 1024
          %317 = vsyncadd [#allocation12], %s316
          %s318 = sshll.u32 [#allocation11], 4
          %s319 = int_to_ptr.vmem [resolvable:$true] %s318
          %324 = dma.hbm_to_vmem [thread:$0]  %s4, 1024, %s319, [#allocation12], 64, 64, 4
        $region24: #{tpu_custom_call.1} parent=11 // pred_fallthru
          _
        // Predicated region
        $region25: #{tpu_custom_call.1} parent=11 // pred_check
          %p325 = pneg %p152
        $region26: #{tpu_custom_call.1} parent=11 // pred_check_branch
          %327 = sbr.rel (%p325) target = $region28
        $region27: #{tpu_custom_call.1} parent=11 // pred_region
          _
        $region28: #{tpu_custom_call.1} parent=11 // pred_fallthru
          _
        // Predicated region
        $region29: #{tpu_custom_call.1} parent=11 // pred_check
          %p328 = pneg %p173
        $region30: #{tpu_custom_call.1} parent=11 // pred_check_branch
          %330 = sbr.rel (%p328) target = $region32
        $region31: #{tpu_custom_call.1} parent=11 // pred_region
          _
        $region32: #{tpu_custom_call.1} parent=11 // pred_fallthru
          _
        // Predicated region
        $region33: #{tpu_custom_call.1} parent=11 // pred_check
          %p331 = pneg %p194
        $region34: #{tpu_custom_call.1} parent=11 // pred_check_branch
          %333 = sbr.rel (%p331) target = $region36
        $region35: #{tpu_custom_call.1} parent=11 // pred_region
          _
        $region36: #{tpu_custom_call.1} parent=11 // pred_fallthru
          _
        // Predicated region
        $region37: #{tpu_custom_call.1} parent=11 // pred_check
          %p334 = pneg %p215
        $region38: #{tpu_custom_call.1} parent=11 // pred_check_branch
          %336 = sbr.rel (%p334) target = $region40
        $region39: #{tpu_custom_call.1} parent=11 // pred_region
          _
        $region40: #{tpu_custom_call.1} parent=11 // pred_fallthru
          _
      $region12: #{tpu_custom_call.1} parent=5 // pred_fallthru
        _
      %p337 = scmp.lt.s32.totalorder %s28, 2
      // Predicated region
      $region41: #{tpu_custom_call.1} parent=5 // pred_check
        %p338 = pneg %p337
      $region42: #{tpu_custom_call.1} parent=5 // pred_check_branch
        %340 = sbr.rel (%p338) target = $region44
      $region43: #{tpu_custom_call.1} parent=5 // pred_region
        // Predicated region
        $region45: #{tpu_custom_call.1} parent=43 // pred_check
          %p341 = pneg %p62
        $region46: #{tpu_custom_call.1} parent=43 // pred_check_branch
          %343 = sbr.rel (%p341) target = $region48
        $region47: #{tpu_custom_call.1} parent=43 // pred_region
          %s344 = sand.u32 %s52, 1
          %s345 = scalar_lea.sflag [#allocation6], %s344
          %s346 = sand.u32 %s52, 1
          %s347 = smul.addr %s346, 8
          %s348 = scalar_lea.vmem [#allocation5], %s347
          %s350 = ssub.s32 128, 128
          %351 = vsyncadd %s345, %s350
          %s352 = smul.addr %s36, 2
          %s353 = smul.addr %s35, 2
          %s354 = sadd.s32 %s352, %s353
          %s355 = smul.addr %s354, 64
          %s356 = scalar_lea.hbm %s1, %s355
          %s357 = sshll.u32 %s348, 4
          %s358 = int_to_ptr.vmem [resolvable:$true] %s357
          %363 = dma.hbm_to_vmem [thread:$0]  %s356, 128, %s358, %s345, 64, 64, 4
        $region48: #{tpu_custom_call.1} parent=43 // pred_fallthru
          _
      $region44: #{tpu_custom_call.1} parent=5 // pred_fallthru
        _
      %p364 = scmp.le.s32.totalorder 1, %s28
      %p365 = scmp.lt.s32.totalorder %s28, 3
      %p366 = pnand %p364, %p365
      %p367 = pneg %p366
      // Predicated region
      $region49: #{tpu_custom_call.1} parent=5 // pred_check
        _
      $region50: #{tpu_custom_call.1} parent=5 // pred_check_branch
        %369 = sbr.rel (%p366) target = $region52
      $region51: #{tpu_custom_call.1} parent=5 // pred_region
        %s370 = ssub.s32 %s28, 1
        %s371 = sand.u32 %s55, 1
        %s372 = scalar_lea.sflag [#allocation6], %s371
        %s373 = sand.u32 %s55, 1
        %s374 = smul.addr %s373, 8
        %s375 = scalar_lea.vmem [#allocation5], %s374
        // Predicated region
        $region53: #{tpu_custom_call.1} parent=51 // pred_check
          %p376 = pneg %p68
        $region54: #{tpu_custom_call.1} parent=51 // pred_check_branch
          %378 = sbr.rel (%p376) target = $region56
        $region55: #{tpu_custom_call.1} parent=51 // pred_region
          %379 = dma.done %s372, 128
        $region56: #{tpu_custom_call.1} parent=51 // pred_fallthru
          _
        // Predicated region
        $region57: #{tpu_custom_call.1} parent=51 // pred_check
          %p380 = pneg %p89
        $region58: #{tpu_custom_call.1} parent=51 // pred_check_branch
          %382 = sbr.rel (%p380) target = $region60
        $region59: #{tpu_custom_call.1} parent=51 // pred_region
          %383 = dma.done [#allocation9], 3072
        $region60: #{tpu_custom_call.1} parent=51 // pred_fallthru
          _
        // Predicated region
        $region61: #{tpu_custom_call.1} parent=51 // pred_check
          %p384 = pneg %p110
        $region62: #{tpu_custom_call.1} parent=51 // pred_check_branch
          %386 = sbr.rel (%p384) target = $region64
        $region63: #{tpu_custom_call.1} parent=51 // pred_region
          %387 = dma.done [#allocation9], 3072
        $region64: #{tpu_custom_call.1} parent=51 // pred_fallthru
          _
        // Predicated region
        $region65: #{tpu_custom_call.1} parent=51 // pred_check
          %p388 = pneg %p131
        $region66: #{tpu_custom_call.1} parent=51 // pred_check_branch
          %390 = sbr.rel (%p388) target = $region68
        $region67: #{tpu_custom_call.1} parent=51 // pred_region
          %391 = dma.done [#allocation12], 1024
        $region68: #{tpu_custom_call.1} parent=51 // pred_fallthru
          _
        %s392 = sand.u32 %s55, 1
        %s393 = scalar_lea.sflag [#allocation6], %s392
        %s394 = sand.u32 %s55, 1
        %s395 = smul.addr %s394, 8
        %s396 = scalar_lea.vmem [#allocation5], %s395
        %p397 = pneg %p68
        %p398 = pneg %p65
        %p399 = pneg %p89
        %p400 = pneg %p86
        %p401 = pneg %p110
        %p402 = pneg %p107
        %p403 = pneg %p131
        %p404 = pneg %p128
        %p405 = pneg %p152
        %p406 = pneg %p149
        %p407 = pneg %p173
        %p408 = pneg %p170
        %p409 = pneg %p194
        %p410 = pneg %p191
        %p411 = pneg %p215
        %p412 = pneg %p212
        %p413 = pneg %p243
        %p414 = pneg %p240
        %s415 = sand.u32 %s230, 1
        %s416 = scalar_lea.sflag [#allocation7], %s415
        %s417 = sand.u32 %s230, 1
        %s418 = smul.addr %s417, 8
        %s419 = scalar_lea.vmem [#allocation13], %s418
        %p420 = pneg %p271
        %p421 = pneg %p268
        %s422 = sand.u32 %s258, 1
        %s423 = scalar_lea.sflag [#allocation15], %s422
        %s424 = sand.u32 %s258, 1
        %s425 = smul.addr %s424, 8
        %s426 = scalar_lea.vmem [#allocation14], %s425
        %p428 = scmp.lt.s32.totalorder %s38, 0
        %s429 = ssub.s32 0, %s38
        %s430 = scalar_select %p428, %s429, %s38
        %s431 = sand.u32 %s430, 1
        %s432 = ssub.s32 0, %s431
        %s433 = scalar_select %p428, %s432, %s431
        %p434 = scmp.ne.s32.totalorder %s433, 0
        %p435 = scmp.lt.s32.totalorder %s433, 0
        %p436 = pnand %p435, %p434
        %p437 = pneg %p436
        %s438 = sadd.s32 %s433, 2
        %s439 = scalar_select %p437, %s438, %s433
        %p440 = scmp.eq.s32.totalorder %s38, 0
        // Predicated region
        $region69: #{tpu_custom_call.1} parent=51 // pred_check
          %p441 = pneg %p440
        $region70: #{tpu_custom_call.1} parent=51 // pred_check_branch
          %443 = sbr.rel (%p441) target = $region72
        $region71: #{tpu_custom_call.1} parent=51 // pred_region
          %s444 = smul.u32 %s37, 32
          %s445 = sshra.s32 %s444, 3
          %s446 = sand.u32 %s444, 7
          %s447 = smul.addr %s445, 64
          %s448 = scalar_lea.hbm %s0, %s447
          // Predicated region
          $region73: #{tpu_custom_call.1} parent=71 // pred_check
            _
          $region74: #{tpu_custom_call.1} parent=71 // pred_check_branch
            %450 = sbr.rel target = $region76
          $region75: #{tpu_custom_call.1} parent=71 // pred_region
            %451 = sst [smem:[#allocation18]] [#allocation17]
            %452 = sst [smem:[#allocation19]] [#allocation16]
          $region76: #{tpu_custom_call.1} parent=71 // pred_fallthru
            _
          %454 = shalt.err (0)
          %s456 = sshll.u32 [#allocation2], 4
          %s457 = int_to_ptr.vmem [resolvable:$true] %s456
          %459 = dma.hbm_to_vmem [thread:$0]  %s448, 256, %s457, [#allocation3]
        $region72: #{tpu_custom_call.1} parent=51 // pred_fallthru
          _
        %s460 = smul.u32 %s439, 2
        %s461 = smul.addr %s460, 8
        %s462 = scalar_lea.vmem [#allocation2], %s461
        %s463 = scalar_lea.sflag [#allocation3], %s439
        %s464 = smul.u32 4, 4
        %s465 = smul.u32 %s464, 1
        %s466 = sshll.u32 %s465, 4
        %467 = dma.done %s463, %s466
        %s468 = sadd.s32 %s38, 1
        %p469 = scmp.lt.s32.totalorder %s468, 1
        // Predicated region
        $region77: #{tpu_custom_call.1} parent=51 // pred_check
          %p470 = pneg %p469
        $region78: #{tpu_custom_call.1} parent=51 // pred_check_branch
          %472 = sbr.rel (%p470) target = $region80
        $region79: #{tpu_custom_call.1} parent=51 // pred_region
          %s473 = ssub.s32 1, %s439
          %s474 = smul.u32 %s37, 32
          %s475 = smul.u32 %s468, 16
          %s476 = sadd.s32 %s474, %s475
          %s477 = sshra.s32 %s476, 3
          %s478 = sand.u32 %s476, 7
          %s479 = smul.addr %s477, 64
          %s480 = scalar_lea.hbm %s0, %s479
          %s481 = smul.u32 %s473, 2
          %s482 = smul.addr %s481, 8
          %s483 = scalar_lea.vmem [#allocation2], %s482
          %s484 = scalar_lea.sflag [#allocation3], %s473
          // Predicated region
          $region81: #{tpu_custom_call.1} parent=79 // pred_check
            _
          $region82: #{tpu_custom_call.1} parent=79 // pred_check_branch
            %486 = sbr.rel target = $region84
          $region83: #{tpu_custom_call.1} parent=79 // pred_region
            %487 = sst [smem:[#allocation18]] [#allocation21]
            %488 = sst [smem:[#allocation19]] [#allocation20]
          $region84: #{tpu_custom_call.1} parent=79 // pred_fallthru
            _
          %490 = shalt.err (0)
          %s492 = sshll.u32 %s483, 4
          %s493 = int_to_ptr.vmem [resolvable:$true] %s492
          %495 = dma.hbm_to_vmem [thread:$0]  %s480, 256, %s493, %s484
        $region80: #{tpu_custom_call.1} parent=51 // pred_fallthru
          _
        %v496 = vld [vmem:[%s462] sm:$0xff]
        %v497 = vld [vmem:[%s462 + $0x8] sm:$0xf]
        %v498 = vld [vmem:[#allocation8] sm:$0xf]
        %v499 = vld [vmem:[#allocation8 + $0x4] sm:$0xf]
        %v500 = vld [vmem:[#allocation8 + $0x8] sm:$0xf]
        %v501 = vld [vmem:[#allocation8 + $0xc] sm:$0xf]
        %v502 = vld [vmem:[#allocation8 + $0x10] sm:$0xf]
        %v503 = vld [vmem:[#allocation8 + $0x14] sm:$0xf]
        %v504 = vld [vmem:[#allocation8 + $0x18] sm:$0xf]
        %v505 = vld [vmem:[#allocation8 + $0x1c] sm:$0xf]
        %v506 = vld [vmem:[#allocation8 + $0x20] sm:$0xf]
        %v507 = vld [vmem:[#allocation8 + $0x24] sm:$0xf]
        %v508 = vld [vmem:[#allocation8 + $0x28] sm:$0xf]
        %v509 = vld [vmem:[#allocation8 + $0x2c] sm:$0xf]
        %v510 = vld [vmem:[#allocation8 + $0x30] sm:$0xf]
        %v511 = vld [vmem:[#allocation8 + $0x34] sm:$0xf]
        %v512 = vld [vmem:[#allocation8 + $0x38] sm:$0xf]
        %v513 = vld [vmem:[#allocation8 + $0x3c] sm:$0xf]
        %v514 = vld [vmem:[%s462 + $0x8] sm:$0x1f]
        %s515 = scalar_lea.vmem [#allocation8], 64
        %v516 = vld [vmem:[%s515] sm:$0xf]
        %v517 = vld [vmem:[%s515 + $0x4] sm:$0xf]
        %v518 = vld [vmem:[%s515 + $0x8] sm:$0xf]
        %v519 = vld [vmem:[%s515 + $0xc] sm:$0xf]
        %v520 = vld [vmem:[%s515 + $0x10] sm:$0xf]
        %v521 = vld [vmem:[%s515 + $0x14] sm:$0xf]
        %v522 = vld [vmem:[%s515 + $0x18] sm:$0xf]
        %v523 = vld [vmem:[%s515 + $0x1c] sm:$0xf]
        %v524 = vld [vmem:[%s515 + $0x20] sm:$0xf]
        %v525 = vld [vmem:[%s515 + $0x24] sm:$0xf]
        %v526 = vld [vmem:[%s515 + $0x28] sm:$0xf]
        %v527 = vld [vmem:[%s515 + $0x2c] sm:$0xf]
        %v528 = vld [vmem:[%s515 + $0x30] sm:$0xf]
        %v529 = vld [vmem:[%s515 + $0x34] sm:$0xf]
        %v530 = vld [vmem:[%s515 + $0x38] sm:$0xf]
        %v531 = vld [vmem:[%s515 + $0x3c] sm:$0xf]
        %vm532 = vsmask.f32 7424
        %v534 = vshrl.u32 %v496, 16
        %v536 = vshll.u32 %v496, 16
        %v538 = vrot.slane %v536, 1
        %v539 = vor.u32 %v534, %v538
        %v541 = vshll.u32 %v514, 16
        %v543 = vrot.slane %v541, 1
        %v544 = vsel %vm532, %v539, %v543
        %v545 = vshrl.u32 %v514, 16
        %v547 = vor.u32 %v545, %v543
        %v566 = vunpack.c.l.b16 %v516
        %v567 = vunpack.c.l.b16 %v517
        %v568 = vunpack.c.l.b16 %v518
        %v569 = vunpack.c.l.b16 %v519
        %v570 = vunpack.c.l.b16 %v520
        %v571 = vunpack.c.l.b16 %v521
        %v572 = vunpack.c.l.b16 %v522
        %v573 = vunpack.c.l.b16 %v523
        %v574 = vunpack.c.l.b16 %v524
        %v575 = vunpack.c.l.b16 %v525
        %v576 = vunpack.c.l.b16 %v526
        %v577 = vunpack.c.l.b16 %v527
        %v578 = vunpack.c.l.b16 %v528
        %v579 = vunpack.c.l.b16 %v529
        %v580 = vunpack.c.l.b16 %v530
        %v581 = vunpack.c.l.b16 %v531
        %v582 = vpack.c.b16 %v567, %v566
        %v583 = vpack.c.b16 %v569, %v568
        %v584 = vpack.c.b16 %v571, %v570
        %v585 = vpack.c.b16 %v573, %v572
        %v586 = vpack.c.b16 %v575, %v574
        %v587 = vpack.c.b16 %v577, %v576
        %v588 = vpack.c.b16 %v579, %v578
        %v589 = vpack.c.b16 %v581, %v580
        %598 = vmatprep.subr.bf16.mxu0 0
        %599 = vmatpush1.bf16.msra.mxu0 %v582
        %600 = vmatprep.subr.bf16.mxu0 0
        %601 = vmatpush1.bf16.msra.mxu0 %v583
        %602 = vmatprep.subr.bf16.mxu0 0
        %603 = vmatpush1.bf16.msra.mxu0 %v584
        %604 = vmatprep.subr.bf16.mxu0 0
        %605 = vmatpush1.bf16.msra.mxu0 %v585
        %606 = vmatprep.subr.bf16.mxu0 0
        %607 = vmatpush1.bf16.msra.mxu0 %v586
        %608 = vmatprep.subr.bf16.mxu0 0
        %609 = vmatpush1.bf16.msra.mxu0 %v587
        %610 = vmatprep.subr.bf16.mxu0 0
        %611 = vmatpush1.bf16.msra.mxu0 %v588
        %612 = vmatprep.subr.bf16.mxu0 0
        %613 = vmatpush1.bf16.msra.mxu0 %v589
        %614 = vmatprep.subr.bf16.mxu0 0
        %615 = vmatpush1.bf16.msra.mxu0 0
        %616 = vmatprep.subr.bf16.mxu0 0
        %617 = vmatpush1.bf16.msra.mxu0 0
        %618 = vmatprep.subr.bf16.mxu0 0
        %619 = vmatpush1.bf16.msra.mxu0 0
        %620 = vmatprep.subr.bf16.mxu0 0
        %621 = vmatpush1.bf16.msra.mxu0 0
        %622 = vmatprep.subr.bf16.mxu0 0
        %623 = vmatpush1.bf16.msra.mxu0 0
        %624 = vmatprep.subr.bf16.mxu0 0
        %625 = vmatpush1.bf16.msra.mxu0 0
        %626 = vmatprep.subr.bf16.mxu0 0
        %627 = vmatpush1.bf16.msra.mxu0 0
        %628 = vmatprep.subr.bf16.mxu0 0
        %629 = vmatpush1.bf16.msra.mxu0 0
        %630 = vmatprep.mubr.bf16.mxu0 0
        %631 = vmatmul.mubr.bf16.gmra.mrb[0].mxu0 %v544
        %v632 = vpop.f32.mrb[0].mxu0
        %v633 = vadd.f32 0.0, %v632
        %v634 = vpop.f32.mrb[0].mxu0
        %v635 = vpop.f32.mrb[0].mxu0
        %v636 = vadd.f32 0.0, %v635
        %v637 = vpop.f32.mrb[0].mxu0
        %638 = vmatprep.mubr.bf16.mxu0 0
        %639 = vmatmul.mubr.bf16.gmra.mrb[0].mxu0 %v547
        %v640 = vpop.f32.mrb[0].mxu0
        %v641 = vadd.f32 0.0, %v640
        %v642 = vpop.f32.mrb[0].mxu0
        %v643 = vpop.f32.mrb[0].mxu0
        %v644 = vpop.f32.mrb[0].mxu0
        %645 = vdwg.mxu0
        %v662 = vunpack.c.l.b16 %v498
        %v663 = vunpack.c.l.b16 %v499
        %v664 = vunpack.c.l.b16 %v500
        %v665 = vunpack.c.l.b16 %v501
        %v666 = vunpack.c.l.b16 %v502
        %v667 = vunpack.c.l.b16 %v503
        %v668 = vunpack.c.l.b16 %v504
        %v669 = vunpack.c.l.b16 %v505
        %v670 = vunpack.c.l.b16 %v506
        %v671 = vunpack.c.l.b16 %v507
        %v672 = vunpack.c.l.b16 %v508
        %v673 = vunpack.c.l.b16 %v509
        %v674 = vunpack.c.l.b16 %v510
        %v675 = vunpack.c.l.b16 %v511
        %v676 = vunpack.c.l.b16 %v512
        %v677 = vunpack.c.l.b16 %v513
        %v678 = vpack.c.b16 %v663, %v662
        %v679 = vpack.c.b16 %v665, %v664
        %v680 = vpack.c.b16 %v667, %v666
        %v681 = vpack.c.b16 %v669, %v668
        %v682 = vpack.c.b16 %v671, %v670
        %v683 = vpack.c.b16 %v673, %v672
        %v684 = vpack.c.b16 %v675, %v674
        %v685 = vpack.c.b16 %v677, %v676
        %694 = vmatprep.subr.bf16.mxu0 0
        %695 = vmatpush1.bf16.msra.mxu0 %v678
        %696 = vmatprep.subr.bf16.mxu0 0
        %697 = vmatpush1.bf16.msra.mxu0 %v679
        %698 = vmatprep.subr.bf16.mxu0 0
        %699 = vmatpush1.bf16.msra.mxu0 %v680
        %700 = vmatprep.subr.bf16.mxu0 0
        %701 = vmatpush1.bf16.msra.mxu0 %v681
        %702 = vmatprep.subr.bf16.mxu0 0
        %703 = vmatpush1.bf16.msra.mxu0 %v682
        %704 = vmatprep.subr.bf16.mxu0 0
        %705 = vmatpush1.bf16.msra.mxu0 %v683
        %706 = vmatprep.subr.bf16.mxu0 0
        %707 = vmatpush1.bf16.msra.mxu0 %v684
        %708 = vmatprep.subr.bf16.mxu0 0
        %709 = vmatpush1.bf16.msra.mxu0 %v685
        %710 = vmatprep.subr.bf16.mxu0 0
        %711 = vmatpush1.bf16.msra.mxu0 0
        %712 = vmatprep.subr.bf16.mxu0 0
        %713 = vmatpush1.bf16.msra.mxu0 0
        %714 = vmatprep.subr.bf16.mxu0 0
        %715 = vmatpush1.bf16.msra.mxu0 0
        %716 = vmatprep.subr.bf16.mxu0 0
        %717 = vmatpush1.bf16.msra.mxu0 0
        %718 = vmatprep.subr.bf16.mxu0 0
        %719 = vmatpush1.bf16.msra.mxu0 0
        %720 = vmatprep.subr.bf16.mxu0 0
        %721 = vmatpush1.bf16.msra.mxu0 0
        %722 = vmatprep.subr.bf16.mxu0 0
        %723 = vmatpush1.bf16.msra.mxu0 0
        %724 = vmatprep.subr.bf16.mxu0 0
        %725 = vmatpush1.bf16.msra.mxu0 0
        %726 = vmatprep.mubr.bf16.mxu0 0
        %727 = vmatmul.mubr.bf16.gmra.mrb[0].mxu0 %v496
        %v728 = vpop.f32.mrb[0].mxu0
        %v729 = vadd.f32 %v633, %v728
        %v730 = vpop.f32.mrb[0].mxu0
        %v731 = vpop.f32.mrb[0].mxu0
        %v732 = vadd.f32 %v636, %v731
        %v733 = vpop.f32.mrb[0].mxu0
        %734 = vmatprep.mubr.bf16.mxu0 0
        %735 = vmatmul.mubr.bf16.gmra.mrb[0].mxu0 %v497
        %v736 = vpop.f32.mrb[0].mxu0
        %v737 = vadd.f32 %v641, %v736
        %v738 = vpop.f32.mrb[0].mxu0
        %v739 = vpop.f32.mrb[0].mxu0
        %v740 = vpop.f32.mrb[0].mxu0
        %741 = vdwg.mxu0
        %v742 = vld [vmem:[%s462] sm:$0xfe]
        %s743 = scalar_lea.vmem [#allocation8], 128
        %v744 = vld [vmem:[%s743] sm:$0xf]
        %v745 = vld [vmem:[%s743 + $0x4] sm:$0xf]
        %v746 = vld [vmem:[%s743 + $0x8] sm:$0xf]
        %v747 = vld [vmem:[%s743 + $0xc] sm:$0xf]
        %v748 = vld [vmem:[%s743 + $0x10] sm:$0xf]
        %v749 = vld [vmem:[%s743 + $0x14] sm:$0xf]
        %v750 = vld [vmem:[%s743 + $0x18] sm:$0xf]
        %v751 = vld [vmem:[%s743 + $0x1c] sm:$0xf]
        %v752 = vld [vmem:[%s743 + $0x20] sm:$0xf]
        %v753 = vld [vmem:[%s743 + $0x24] sm:$0xf]
        %v754 = vld [vmem:[%s743 + $0x28] sm:$0xf]
        %v755 = vld [vmem:[%s743 + $0x2c] sm:$0xf]
        %v756 = vld [vmem:[%s743 + $0x30] sm:$0xf]
        %v757 = vld [vmem:[%s743 + $0x34] sm:$0xf]
        %v758 = vld [vmem:[%s743 + $0x38] sm:$0xf]
        %v759 = vld [vmem:[%s743 + $0x3c] sm:$0xf]
        %vm762 = vcmask 1046528
        %v763 = vrot.slane %v742, 1
        %v764 = vrot.slane %v514, 1
        %v765 = vsel %vm762, %v763, %v764
        %v784 = vunpack.c.l.b16 %v744
        %v785 = vunpack.c.l.b16 %v745
        %v786 = vunpack.c.l.b16 %v746
        %v787 = vunpack.c.l.b16 %v747
        %v788 = vunpack.c.l.b16 %v748
        %v789 = vunpack.c.l.b16 %v749
        %v790 = vunpack.c.l.b16 %v750
        %v791 = vunpack.c.l.b16 %v751
        %v792 = vunpack.c.l.b16 %v752
        %v793 = vunpack.c.l.b16 %v753
        %v794 = vunpack.c.l.b16 %v754
        %v795 = vunpack.c.l.b16 %v755
        %v796 = vunpack.c.l.b16 %v756
        %v797 = vunpack.c.l.b16 %v757
        %v798 = vunpack.c.l.b16 %v758
        %v799 = vunpack.c.l.b16 %v759
        %v800 = vpack.c.b16 %v785, %v784
        %v801 = vpack.c.b16 %v787, %v786
        %v802 = vpack.c.b16 %v789, %v788
        %v803 = vpack.c.b16 %v791, %v790
        %v804 = vpack.c.b16 %v793, %v792
        %v805 = vpack.c.b16 %v795, %v794
        %v806 = vpack.c.b16 %v797, %v796
        %v807 = vpack.c.b16 %v799, %v798
        %816 = vmatprep.subr.bf16.mxu0 0
        %817 = vmatpush1.bf16.msra.mxu0 %v800
        %818 = vmatprep.subr.bf16.mxu0 0
        %819 = vmatpush1.bf16.msra.mxu0 %v801
        %820 = vmatprep.subr.bf16.mxu0 0
        %821 = vmatpush1.bf16.msra.mxu0 %v802
        %822 = vmatprep.subr.bf16.mxu0 0
        %823 = vmatpush1.bf16.msra.mxu0 %v803
        %824 = vmatprep.subr.bf16.mxu0 0
        %825 = vmatpush1.bf16.msra.mxu0 %v804
        %826 = vmatprep.subr.bf16.mxu0 0
        %827 = vmatpush1.bf16.msra.mxu0 %v805
        %828 = vmatprep.subr.bf16.mxu0 0
        %829 = vmatpush1.bf16.msra.mxu0 %v806
        %830 = vmatprep.subr.bf16.mxu0 0
        %831 = vmatpush1.bf16.msra.mxu0 %v807
        %832 = vmatprep.subr.bf16.mxu0 0
        %833 = vmatpush1.bf16.msra.mxu0 0
        %834 = vmatprep.subr.bf16.mxu0 0
        %835 = vmatpush1.bf16.msra.mxu0 0
        %836 = vmatprep.subr.bf16.mxu0 0
        %837 = vmatpush1.bf16.msra.mxu0 0
        %838 = vmatprep.subr.bf16.mxu0 0
        %839 = vmatpush1.bf16.msra.mxu0 0
        %840 = vmatprep.subr.bf16.mxu0 0
        %841 = vmatpush1.bf16.msra.mxu0 0
        %842 = vmatprep.subr.bf16.mxu0 0
        %843 = vmatpush1.bf16.msra.mxu0 0
        %844 = vmatprep.subr.bf16.mxu0 0
        %845 = vmatpush1.bf16.msra.mxu0 0
        %846 = vmatprep.subr.bf16.mxu0 0
        %847 = vmatpush1.bf16.msra.mxu0 0
        %848 = vmatprep.mubr.bf16.mxu0 0
        %849 = vmatmul.mubr.bf16.gmra.mrb[0].mxu0 %v765
        %v850 = vpop.f32.mrb[0].mxu0
        %v851 = vadd.f32 0.0, %v850
        %v852 = vpop.f32.mrb[0].mxu0
        %v853 = vpop.f32.mrb[0].mxu0
        %v854 = vadd.f32 0.0, %v853
        %v855 = vpop.f32.mrb[0].mxu0
        %856 = vmatprep.mubr.bf16.mxu0 0
        %857 = vmatmul.mubr.bf16.gmra.mrb[0].mxu0 %v764
        %v858 = vpop.f32.mrb[0].mxu0
        %v859 = vadd.f32 0.0, %v858
        %v860 = vpop.f32.mrb[0].mxu0
        %v861 = vpop.f32.mrb[0].mxu0
        %v862 = vpop.f32.mrb[0].mxu0
        %863 = vdwg.mxu0
        %v864 = vadd.f32 %v729, %v851
        %v865 = vadd.f32 %v732, %v854
        %v866 = vadd.f32 %v737, %v859
        %v867 = vld [vmem:[%s5] sm:$0x1]
        %v869 = vlaneseq
        %v870 = vshrl.u32 %v869, 7
        %v871 = vsub.s32 0, %v870
        %v872 = vrot.slane %v867, %v871
        %v874 = vmul.f32 %v864, %v872
        %v875 = vmul.f32 %v865, %v872
        %v876 = vmul.f32 %v866, %v872
        %v877 = vld [vmem:[%s6] sm:$0x1]
        %v879 = vlaneseq
        %v880 = vshrl.u32 %v879, 7
        %v881 = vsub.s32 0, %v880
        %v882 = vrot.slane %v877, %v881
        %v884 = vadd.f32 %v874, %v882
        %v885 = vadd.f32 %v875, %v882
        %v886 = vadd.f32 %v876, %v882
        %v887 = vmax.f32 %v884, 0.0
        %v888 = vmax.f32 %v885, 0.0
        %v889 = vmax.f32 %v886, 0.0
        %890 = vst [vmem:[#allocation4] sm:$0xff] %v887
        %891 = vst [vmem:[#allocation4 + $0x8] sm:$0xff] %v888
        %892 = vst [vmem:[#allocation4 + $0x10] sm:$0xff] %v889
        %s893 = smul.u32 %s38, 16
        %p894 = scmp.lt.s32.totalorder %s893, 1
        %s895 = sadd.s32 %s893, 16
        %p896 = scmp.gt.s32.totalorder %s895, 16
        %p897 = por %p894, %p896
        // Predicated region
        $region85: #{tpu_custom_call.1} parent=51 // pred_check
          %p898 = pneg %p897
        $region86: #{tpu_custom_call.1} parent=51 // pred_check_branch
          %900 = sbr.rel (%p898) target = $region88
        $region87: #{tpu_custom_call.1} parent=51 // pred_region
          %s901 = ssub.s32 %s893, 1
          %v902 = vlaneseq
          %v903 = vshrl.u32 %v902, 7
          %v904 = vadd.s32 %v903, 8
          %v905 = vadd.s32 %v903, 16
          %v906 = vstv %s901
          %v907 = vadd.s32 %v906, %v903
          %v908 = vadd.s32 %v906, %v904
          %v909 = vadd.s32 %v906, %v905
          %vm910 = vcmp.ge.s32.totalorder %v907, 0
          %vm911 = vcmp.ge.s32.totalorder %v908, 0
          %vm912 = vcmp.ge.s32.totalorder %v909, 0
          %vm913 = vcmp.lt.s32.totalorder %v907, 16
          %vm914 = vcmp.lt.s32.totalorder %v908, 16
          %vm915 = vcmp.lt.s32.totalorder %v909, 16
          %vm916 = vmand %vm910, %vm913
          %vm917 = vmand %vm911, %vm914
          %vm918 = vmand %vm912, %vm915
          %v919 = vld [vmem:[#allocation4] sm:$0xff]
          %v920 = vld [vmem:[#allocation4 + $0x8] sm:$0xff]
          %v921 = vld [vmem:[#allocation4 + $0x10] sm:$0xff]
          %v922 = vsel %vm916, 1, 0
          %v923 = vsel %vm917, 1, 0
          %v924 = vsel %vm918, 1, 0
          %v925 = vcvt.s32.f32 %v922
          %v926 = vcvt.s32.f32 %v923
          %v927 = vcvt.s32.f32 %v924
          %v928 = vmul.f32 %v919, %v925
          %v929 = vmul.f32 %v920, %v926
          %v930 = vmul.f32 %v921, %v927
          %931 = vst [vmem:[#allocation4] sm:$0xff] %v928
          %932 = vst [vmem:[#allocation4 + $0x8] sm:$0xff] %v929
          %933 = vst [vmem:[#allocation4 + $0x10] sm:$0xff] %v930
        $region88: #{tpu_custom_call.1} parent=51 // pred_fallthru
          _
        %v934 = vld [vmem:[%s375] sm:$0xf]
        %s935 = scalar_lea.vmem %s375, 4 [#allocation5]
        %v936 = vld [vmem:[%s935] sm:$0xf]
        %v937 = vmax.bf16 %v934, %v936
        %v938 = vld [vmem:[#allocation11] sm:$0xf]
        %v939 = vld [vmem:[#allocation11 + $0x4] sm:$0xf]
        %v940 = vld [vmem:[#allocation11 + $0x8] sm:$0xf]
        %v941 = vld [vmem:[#allocation11 + $0xc] sm:$0xf]
        %v942 = vld [vmem:[#allocation11 + $0x10] sm:$0xf]
        %v943 = vld [vmem:[#allocation11 + $0x14] sm:$0xf]
        %v944 = vld [vmem:[#allocation11 + $0x18] sm:$0xf]
        %v945 = vld [vmem:[#allocation11 + $0x1c] sm:$0xf]
        %v946 = vld [vmem:[#allocation11 + $0x20] sm:$0xf]
        %v947 = vld [vmem:[#allocation11 + $0x24] sm:$0xf]
        %v948 = vld [vmem:[#allocation11 + $0x28] sm:$0xf]
        %v949 = vld [vmem:[#allocation11 + $0x2c] sm:$0xf]
        %v950 = vld [vmem:[#allocation11 + $0x30] sm:$0xf]
        %v951 = vld [vmem:[#allocation11 + $0x34] sm:$0xf]
        %v952 = vld [vmem:[#allocation11 + $0x38] sm:$0xf]
        %v953 = vld [vmem:[#allocation11 + $0x3c] sm:$0xf]
        %v954 = vld [vmem:[#allocation4] ss:$2 sm:$0xff]
        %v955 = vpack.c.bf16 %v954, %v954
        %v956 = vld [vmem:[#allocation10] sm:$0xf]
        %v957 = vld [vmem:[#allocation10 + $0x4] sm:$0xf]
        %v958 = vld [vmem:[#allocation10 + $0x8] sm:$0xf]
        %v959 = vld [vmem:[#allocation10 + $0xc] sm:$0xf]
        %v960 = vld [vmem:[#allocation10 + $0x10] sm:$0xf]
        %v961 = vld [vmem:[#allocation10 + $0x14] sm:$0xf]
        %v962 = vld [vmem:[#allocation10 + $0x18] sm:$0xf]
        %v963 = vld [vmem:[#allocation10 + $0x1c] sm:$0xf]
        %v964 = vld [vmem:[#allocation10 + $0x20] sm:$0xf]
        %v965 = vld [vmem:[#allocation10 + $0x24] sm:$0xf]
        %v966 = vld [vmem:[#allocation10 + $0x28] sm:$0xf]
        %v967 = vld [vmem:[#allocation10 + $0x2c] sm:$0xf]
        %v968 = vld [vmem:[#allocation10 + $0x30] sm:$0xf]
        %v969 = vld [vmem:[#allocation10 + $0x34] sm:$0xf]
        %v970 = vld [vmem:[#allocation10 + $0x38] sm:$0xf]
        %v971 = vld [vmem:[#allocation10 + $0x3c] sm:$0xf]
        %v988 = vunpack.c.l.b16 %v956
        %v989 = vunpack.c.l.b16 %v957
        %v990 = vunpack.c.l.b16 %v958
        %v991 = vunpack.c.l.b16 %v959
        %v992 = vunpack.c.l.b16 %v960
        %v993 = vunpack.c.l.b16 %v961
        %v994 = vunpack.c.l.b16 %v962
        %v995 = vunpack.c.l.b16 %v963
        %v996 = vunpack.c.l.b16 %v964
        %v997 = vunpack.c.l.b16 %v965
        %v998 = vunpack.c.l.b16 %v966
        %v999 = vunpack.c.l.b16 %v967
        %v1000 = vunpack.c.l.b16 %v968
        %v1001 = vunpack.c.l.b16 %v969
        %v1002 = vunpack.c.l.b16 %v970
        %v1003 = vunpack.c.l.b16 %v971
        %v1004 = vpack.c.b16 %v989, %v988
        %v1005 = vpack.c.b16 %v991, %v990
        %v1006 = vpack.c.b16 %v993, %v992
        %v1007 = vpack.c.b16 %v995, %v994
        %v1008 = vpack.c.b16 %v997, %v996
        %v1009 = vpack.c.b16 %v999, %v998
        %v1010 = vpack.c.b16 %v1001, %v1000
        %v1011 = vpack.c.b16 %v1003, %v1002
        %1020 = vmatprep.subr.bf16.mxu0 0
        %1021 = vmatpush1.bf16.msra.mxu0 %v1004
        %1022 = vmatprep.subr.bf16.mxu0 0
        %1023 = vmatpush1.bf16.msra.mxu0 %v1005
        %1024 = vmatprep.subr.bf16.mxu0 0
        %1025 = vmatpush1.bf16.msra.mxu0 %v1006
        %1026 = vmatprep.subr.bf16.mxu0 0
        %1027 = vmatpush1.bf16.msra.mxu0 %v1007
        %1028 = vmatprep.subr.bf16.mxu0 0
        %1029 = vmatpush1.bf16.msra.mxu0 %v1008
        %1030 = vmatprep.subr.bf16.mxu0 0
        %1031 = vmatpush1.bf16.msra.mxu0 %v1009
        %1032 = vmatprep.subr.bf16.mxu0 0
        %1033 = vmatpush1.bf16.msra.mxu0 %v1010
        %1034 = vmatprep.subr.bf16.mxu0 0
        %1035 = vmatpush1.bf16.msra.mxu0 %v1011
        %1036 = vmatprep.subr.bf16.mxu0 0
        %1037 = vmatpush1.bf16.msra.mxu0 0
        %1038 = vmatprep.subr.bf16.mxu0 0
        %1039 = vmatpush1.bf16.msra.mxu0 0
        %1040 = vmatprep.subr.bf16.mxu0 0
        %1041 = vmatpush1.bf16.msra.mxu0 0
        %1042 = vmatprep.subr.bf16.mxu0 0
        %1043 = vmatpush1.bf16.msra.mxu0 0
        %1044 = vmatprep.subr.bf16.mxu0 0
        %1045 = vmatpush1.bf16.msra.mxu0 0
        %1046 = vmatprep.subr.bf16.mxu0 0
        %1047 = vmatpush1.bf16.msra.mxu0 0
        %1048 = vmatprep.subr.bf16.mxu0 0
        %1049 = vmatpush1.bf16.msra.mxu0 0
        %1050 = vmatprep.subr.bf16.mxu0 0
        %1051 = vmatpush1.bf16.msra.mxu0 0
        %1052 = vmatprep.mubr.bf16.mxu0 0
        %1053 = vmatmul.mubr.bf16.gmra.mrb[0].mxu0 %v955
        %v1054 = vpop.f32.mrb[0].mxu0
        %v1055 = vadd.f32 0.0, %v1054
        %v1056 = vpop.f32.mrb[0].mxu0
        %v1057 = vpop.f32.mrb[0].mxu0
        %v1058 = vpop.f32.mrb[0].mxu0
        %1059 = vdwg.mxu0
        %v1076 = vunpack.c.l.b16 %v938
        %v1077 = vunpack.c.l.b16 %v939
        %v1078 = vunpack.c.l.b16 %v940
        %v1079 = vunpack.c.l.b16 %v941
        %v1080 = vunpack.c.l.b16 %v942
        %v1081 = vunpack.c.l.b16 %v943
        %v1082 = vunpack.c.l.b16 %v944
        %v1083 = vunpack.c.l.b16 %v945
        %v1084 = vunpack.c.l.b16 %v946
        %v1085 = vunpack.c.l.b16 %v947
        %v1086 = vunpack.c.l.b16 %v948
        %v1087 = vunpack.c.l.b16 %v949
        %v1088 = vunpack.c.l.b16 %v950
        %v1089 = vunpack.c.l.b16 %v951
        %v1090 = vunpack.c.l.b16 %v952
        %v1091 = vunpack.c.l.b16 %v953
        %v1092 = vpack.c.b16 %v1077, %v1076
        %v1093 = vpack.c.b16 %v1079, %v1078
        %v1094 = vpack.c.b16 %v1081, %v1080
        %v1095 = vpack.c.b16 %v1083, %v1082
        %v1096 = vpack.c.b16 %v1085, %v1084
        %v1097 = vpack.c.b16 %v1087, %v1086
        %v1098 = vpack.c.b16 %v1089, %v1088
        %v1099 = vpack.c.b16 %v1091, %v1090
        %1108 = vmatprep.subr.bf16.mxu0 0
        %1109 = vmatpush1.bf16.msra.mxu0 %v1092
        %1110 = vmatprep.subr.bf16.mxu0 0
        %1111 = vmatpush1.bf16.msra.mxu0 %v1093
        %1112 = vmatprep.subr.bf16.mxu0 0
        %1113 = vmatpush1.bf16.msra.mxu0 %v1094
        %1114 = vmatprep.subr.bf16.mxu0 0
        %1115 = vmatpush1.bf16.msra.mxu0 %v1095
        %1116 = vmatprep.subr.bf16.mxu0 0
        %1117 = vmatpush1.bf16.msra.mxu0 %v1096
        %1118 = vmatprep.subr.bf16.mxu0 0
        %1119 = vmatpush1.bf16.msra.mxu0 %v1097
        %1120 = vmatprep.subr.bf16.mxu0 0
        %1121 = vmatpush1.bf16.msra.mxu0 %v1098
        %1122 = vmatprep.subr.bf16.mxu0 0
        %1123 = vmatpush1.bf16.msra.mxu0 %v1099
        %1124 = vmatprep.subr.bf16.mxu0 0
        %1125 = vmatpush1.bf16.msra.mxu0 0
        %1126 = vmatprep.subr.bf16.mxu0 0
        %1127 = vmatpush1.bf16.msra.mxu0 0
        %1128 = vmatprep.subr.bf16.mxu0 0
        %1129 = vmatpush1.bf16.msra.mxu0 0
        %1130 = vmatprep.subr.bf16.mxu0 0
        %1131 = vmatpush1.bf16.msra.mxu0 0
        %1132 = vmatprep.subr.bf16.mxu0 0
        %1133 = vmatpush1.bf16.msra.mxu0 0
        %1134 = vmatprep.subr.bf16.mxu0 0
        %1135 = vmatpush1.bf16.msra.mxu0 0
        %1136 = vmatprep.subr.bf16.mxu0 0
        %1137 = vmatpush1.bf16.msra.mxu0 0
        %1138 = vmatprep.subr.bf16.mxu0 0
        %1139 = vmatpush1.bf16.msra.mxu0 0
        %1140 = vmatprep.mubr.bf16.mxu0 0
        %1141 = vmatmul.mubr.bf16.gmra.mrb[0].mxu0 %v937
        %v1142 = vpop.f32.mrb[0].mxu0
        %v1143 = vadd.f32 %v1055, %v1142
        %v1144 = vpop.f32.mrb[0].mxu0
        %v1145 = vpop.f32.mrb[0].mxu0
        %v1146 = vpop.f32.mrb[0].mxu0
        %1147 = vdwg.mxu0
        %s1148 = scalar_lea.vmem [#allocation4], 1
        %v1149 = vld [vmem:[%s1148] ss:$2 sm:$0xff]
        %v1150 = vpack.c.bf16 %v1149, %v1149
        %s1151 = scalar_lea.vmem [#allocation10], 64
        %v1152 = vld [vmem:[%s1151] sm:$0xf]
        %v1153 = vld [vmem:[%s1151 + $0x4] sm:$0xf]
        %v1154 = vld [vmem:[%s1151 + $0x8] sm:$0xf]
        %v1155 = vld [vmem:[%s1151 + $0xc] sm:$0xf]
        %v1156 = vld [vmem:[%s1151 + $0x10] sm:$0xf]
        %v1157 = vld [vmem:[%s1151 + $0x14] sm:$0xf]
        %v1158 = vld [vmem:[%s1151 + $0x18] sm:$0xf]
        %v1159 = vld [vmem:[%s1151 + $0x1c] sm:$0xf]
        %v1160 = vld [vmem:[%s1151 + $0x20] sm:$0xf]
        %v1161 = vld [vmem:[%s1151 + $0x24] sm:$0xf]
        %v1162 = vld [vmem:[%s1151 + $0x28] sm:$0xf]
        %v1163 = vld [vmem:[%s1151 + $0x2c] sm:$0xf]
        %v1164 = vld [vmem:[%s1151 + $0x30] sm:$0xf]
        %v1165 = vld [vmem:[%s1151 + $0x34] sm:$0xf]
        %v1166 = vld [vmem:[%s1151 + $0x38] sm:$0xf]
        %v1167 = vld [vmem:[%s1151 + $0x3c] sm:$0xf]
        %v1184 = vunpack.c.l.b16 %v1152
        %v1185 = vunpack.c.l.b16 %v1153
        %v1186 = vunpack.c.l.b16 %v1154
        %v1187 = vunpack.c.l.b16 %v1155
        %v1188 = vunpack.c.l.b16 %v1156
        %v1189 = vunpack.c.l.b16 %v1157
        %v1190 = vunpack.c.l.b16 %v1158
        %v1191 = vunpack.c.l.b16 %v1159
        %v1192 = vunpack.c.l.b16 %v1160
        %v1193 = vunpack.c.l.b16 %v1161
        %v1194 = vunpack.c.l.b16 %v1162
        %v1195 = vunpack.c.l.b16 %v1163
        %v1196 = vunpack.c.l.b16 %v1164
        %v1197 = vunpack.c.l.b16 %v1165
        %v1198 = vunpack.c.l.b16 %v1166
        %v1199 = vunpack.c.l.b16 %v1167
        %v1200 = vpack.c.b16 %v1185, %v1184
        %v1201 = vpack.c.b16 %v1187, %v1186
        %v1202 = vpack.c.b16 %v1189, %v1188
        %v1203 = vpack.c.b16 %v1191, %v1190
        %v1204 = vpack.c.b16 %v1193, %v1192
        %v1205 = vpack.c.b16 %v1195, %v1194
        %v1206 = vpack.c.b16 %v1197, %v1196
        %v1207 = vpack.c.b16 %v1199, %v1198
        %1216 = vmatprep.subr.bf16.mxu0 0
        %1217 = vmatpush1.bf16.msra.mxu0 %v1200
        %1218 = vmatprep.subr.bf16.mxu0 0
        %1219 = vmatpush1.bf16.msra.mxu0 %v1201
        %1220 = vmatprep.subr.bf16.mxu0 0
        %1221 = vmatpush1.bf16.msra.mxu0 %v1202
        %1222 = vmatprep.subr.bf16.mxu0 0
        %1223 = vmatpush1.bf16.msra.mxu0 %v1203
        %1224 = vmatprep.subr.bf16.mxu0 0
        %1225 = vmatpush1.bf16.msra.mxu0 %v1204
        %1226 = vmatprep.subr.bf16.mxu0 0
        %1227 = vmatpush1.bf16.msra.mxu0 %v1205
        %1228 = vmatprep.subr.bf16.mxu0 0
        %1229 = vmatpush1.bf16.msra.mxu0 %v1206
        %1230 = vmatprep.subr.bf16.mxu0 0
        %1231 = vmatpush1.bf16.msra.mxu0 %v1207
        %1232 = vmatprep.subr.bf16.mxu0 0
        %1233 = vmatpush1.bf16.msra.mxu0 0
        %1234 = vmatprep.subr.bf16.mxu0 0
        %1235 = vmatpush1.bf16.msra.mxu0 0
        %1236 = vmatprep.subr.bf16.mxu0 0
        %1237 = vmatpush1.bf16.msra.mxu0 0
        %1238 = vmatprep.subr.bf16.mxu0 0
        %1239 = vmatpush1.bf16.msra.mxu0 0
        %1240 = vmatprep.subr.bf16.mxu0 0
        %1241 = vmatpush1.bf16.msra.mxu0 0
        %1242 = vmatprep.subr.bf16.mxu0 0
        %1243 = vmatpush1.bf16.msra.mxu0 0
        %1244 = vmatprep.subr.bf16.mxu0 0
        %1245 = vmatpush1.bf16.msra.mxu0 0
        %1246 = vmatprep.subr.bf16.mxu0 0
        %1247 = vmatpush1.bf16.msra.mxu0 0
        %1248 = vmatprep.mubr.bf16.mxu0 0
        %1249 = vmatmul.mubr.bf16.gmra.mrb[0].mxu0 %v1150
        %v1250 = vpop.f32.mrb[0].mxu0
        %v1251 = vadd.f32 0.0, %v1250
        %v1252 = vpop.f32.mrb[0].mxu0
        %v1253 = vpop.f32.mrb[0].mxu0
        %v1254 = vpop.f32.mrb[0].mxu0
        %1255 = vdwg.mxu0
        %v1256 = vadd.f32 %v1143, %v1251
        %s1257 = scalar_lea.vmem [#allocation4], 2
        %v1258 = vld [vmem:[%s1257] ss:$2 sm:$0xff]
        %v1259 = vpack.c.bf16 %v1258, %v1258
        %s1260 = scalar_lea.vmem [#allocation10], 128
        %v1261 = vld [vmem:[%s1260] sm:$0xf]
        %v1262 = vld [vmem:[%s1260 + $0x4] sm:$0xf]
        %v1263 = vld [vmem:[%s1260 + $0x8] sm:$0xf]
        %v1264 = vld [vmem:[%s1260 + $0xc] sm:$0xf]
        %v1265 = vld [vmem:[%s1260 + $0x10] sm:$0xf]
        %v1266 = vld [vmem:[%s1260 + $0x14] sm:$0xf]
        %v1267 = vld [vmem:[%s1260 + $0x18] sm:$0xf]
        %v1268 = vld [vmem:[%s1260 + $0x1c] sm:$0xf]
        %v1269 = vld [vmem:[%s1260 + $0x20] sm:$0xf]
        %v1270 = vld [vmem:[%s1260 + $0x24] sm:$0xf]
        %v1271 = vld [vmem:[%s1260 + $0x28] sm:$0xf]
        %v1272 = vld [vmem:[%s1260 + $0x2c] sm:$0xf]
        %v1273 = vld [vmem:[%s1260 + $0x30] sm:$0xf]
        %v1274 = vld [vmem:[%s1260 + $0x34] sm:$0xf]
        %v1275 = vld [vmem:[%s1260 + $0x38] sm:$0xf]
        %v1276 = vld [vmem:[%s1260 + $0x3c] sm:$0xf]
        %v1293 = vunpack.c.l.b16 %v1261
        %v1294 = vunpack.c.l.b16 %v1262
        %v1295 = vunpack.c.l.b16 %v1263
        %v1296 = vunpack.c.l.b16 %v1264
        %v1297 = vunpack.c.l.b16 %v1265
        %v1298 = vunpack.c.l.b16 %v1266
        %v1299 = vunpack.c.l.b16 %v1267
        %v1300 = vunpack.c.l.b16 %v1268
        %v1301 = vunpack.c.l.b16 %v1269
        %v1302 = vunpack.c.l.b16 %v1270
        %v1303 = vunpack.c.l.b16 %v1271
        %v1304 = vunpack.c.l.b16 %v1272
        %v1305 = vunpack.c.l.b16 %v1273
        %v1306 = vunpack.c.l.b16 %v1274
        %v1307 = vunpack.c.l.b16 %v1275
        %v1308 = vunpack.c.l.b16 %v1276
        %v1309 = vpack.c.b16 %v1294, %v1293
        %v1310 = vpack.c.b16 %v1296, %v1295
        %v1311 = vpack.c.b16 %v1298, %v1297
        %v1312 = vpack.c.b16 %v1300, %v1299
        %v1313 = vpack.c.b16 %v1302, %v1301
        %v1314 = vpack.c.b16 %v1304, %v1303
        %v1315 = vpack.c.b16 %v1306, %v1305
        %v1316 = vpack.c.b16 %v1308, %v1307
        %1325 = vmatprep.subr.bf16.mxu0 0
        %1326 = vmatpush1.bf16.msra.mxu0 %v1309
        %1327 = vmatprep.subr.bf16.mxu0 0
        %1328 = vmatpush1.bf16.msra.mxu0 %v1310
        %1329 = vmatprep.subr.bf16.mxu0 0
        %1330 = vmatpush1.bf16.msra.mxu0 %v1311
        %1331 = vmatprep.subr.bf16.mxu0 0
        %1332 = vmatpush1.bf16.msra.mxu0 %v1312
        %1333 = vmatprep.subr.bf16.mxu0 0
        %1334 = vmatpush1.bf16.msra.mxu0 %v1313
        %1335 = vmatprep.subr.bf16.mxu0 0
        %1336 = vmatpush1.bf16.msra.mxu0 %v1314
        %1337 = vmatprep.subr.bf16.mxu0 0
        %1338 = vmatpush1.bf16.msra.mxu0 %v1315
        %1339 = vmatprep.subr.bf16.mxu0 0
        %1340 = vmatpush1.bf16.msra.mxu0 %v1316
        %1341 = vmatprep.subr.bf16.mxu0 0
        %1342 = vmatpush1.bf16.msra.mxu0 0
        %1343 = vmatprep.subr.bf16.mxu0 0
        %1344 = vmatpush1.bf16.msra.mxu0 0
        %1345 = vmatprep.subr.bf16.mxu0 0
        %1346 = vmatpush1.bf16.msra.mxu0 0
        %1347 = vmatprep.subr.bf16.mxu0 0
        %1348 = vmatpush1.bf16.msra.mxu0 0
        %1349 = vmatprep.subr.bf16.mxu0 0
        %1350 = vmatpush1.bf16.msra.mxu0 0
        %1351 = vmatprep.subr.bf16.mxu0 0
        %1352 = vmatpush1.bf16.msra.mxu0 0
        %1353 = vmatprep.subr.bf16.mxu0 0
        %1354 = vmatpush1.bf16.msra.mxu0 0
        %1355 = vmatprep.subr.bf16.mxu0 0
        %1356 = vmatpush1.bf16.msra.mxu0 0
        %1357 = vmatprep.mubr.bf16.mxu0 0
        %1358 = vmatmul.mubr.bf16.gmra.mrb[0].mxu0 %v1259
        %v1359 = vpop.f32.mrb[0].mxu0
        %v1360 = vadd.f32 0.0, %v1359
        %v1361 = vpop.f32.mrb[0].mxu0
        %v1362 = vpop.f32.mrb[0].mxu0
        %v1363 = vpop.f32.mrb[0].mxu0
        %1364 = vdwg.mxu0
        %v1365 = vadd.f32 %v1256, %v1360
        %1366 = vst [vmem:[%s426] sm:$0xff] %v1365
        %v1367 = vld [vmem:[%s7] sm:$0x1]
        %v1369 = vlaneseq
        %v1370 = vshrl.u32 %v1369, 7
        %v1371 = vsub.s32 0, %v1370
        %v1372 = vrot.slane %v1367, %v1371
        %v1374 = vmul.f32 %v1365, %v1372
        %v1375 = vld [vmem:[%s8] sm:$0x1]
        %v1377 = vlaneseq
        %v1378 = vshrl.u32 %v1377, 7
        %v1379 = vsub.s32 0, %v1378
        %v1380 = vrot.slane %v1375, %v1379
        %v1382 = vadd.f32 %v1374, %v1380
        %v1383 = vmax.f32 %v1382, 0.0
        %1384 = vst [vmem:[%s419] sm:$0xff] %v1383
        %s1385 = sand.u32 %s230, 1
        %s1386 = scalar_lea.sflag [#allocation7], %s1385
        %s1387 = sand.u32 %s230, 1
        %s1388 = smul.addr %s1387, 8
        %s1389 = scalar_lea.vmem [#allocation13], %s1388
        %s1390 = sand.u32 %s258, 1
        %s1391 = scalar_lea.sflag [#allocation15], %s1390
        %s1392 = sand.u32 %s258, 1
        %s1393 = smul.addr %s1392, 8
        %s1394 = scalar_lea.vmem [#allocation14], %s1393
        // Predicated region
        $region89: #{tpu_custom_call.1} parent=51 // pred_check
          %p1395 = pneg %p240
        $region90: #{tpu_custom_call.1} parent=51 // pred_check_branch
          %1397 = sbr.rel (%p1395) target = $region92
        $region91: #{tpu_custom_call.1} parent=51 // pred_region
          %s1399 = ssub.s32 128, 128
          %1400 = vsyncadd %s1386, %s1399
          %s1401 = sadd.s32 %s38, %s37
          %s1402 = smul.addr %s1401, 128
          %s1403 = scalar_lea.hbm %s9, %s1402
          %s1405 = sshll.u32 %s1389, 4
          %s1406 = int_to_ptr.vmem [resolvable:$true] %s1405
          %1408 = dma.vmem_to_hbm [thread:$0]  %s1406, 128, %s1403, %s1386
        $region92: #{tpu_custom_call.1} parent=51 // pred_fallthru
          _
        // Predicated region
        $region93: #{tpu_custom_call.1} parent=51 // pred_check
          %p1409 = pneg %p268
        $region94: #{tpu_custom_call.1} parent=51 // pred_check_branch
          %1411 = sbr.rel (%p1409) target = $region96
        $region95: #{tpu_custom_call.1} parent=51 // pred_region
          %s1413 = ssub.s32 128, 128
          %1414 = vsyncadd %s1391, %s1413
          %s1415 = sadd.s32 %s38, %s37
          %s1416 = smul.addr %s1415, 128
          %s1417 = scalar_lea.hbm %s10, %s1416
          %s1419 = sshll.u32 %s1394, 4
          %s1420 = int_to_ptr.vmem [resolvable:$true] %s1419
          %1422 = dma.vmem_to_hbm [thread:$0]  %s1420, 128, %s1417, %s1391
        $region96: #{tpu_custom_call.1} parent=51 // pred_fallthru
          _
      $region52: #{tpu_custom_call.1} parent=5 // pred_fallthru
        _
      %p1423 = scmp.le.s32.totalorder 2, %s28
      // Predicated region
      $region97: #{tpu_custom_call.1} parent=5 // pred_check
        %p1424 = pneg %p1423
      $region98: #{tpu_custom_call.1} parent=5 // pred_check_branch
        %1426 = sbr.rel (%p1424) target = $region100
      $region99: #{tpu_custom_call.1} parent=5 // pred_region
        %s1427 = ssub.s32 %s28, 2
        // Predicated region
        $region101: #{tpu_custom_call.1} parent=99 // pred_check
          %p1428 = pneg %p246
        $region102: #{tpu_custom_call.1} parent=99 // pred_check_branch
          %1430 = sbr.rel (%p1428) target = $region104
        $region103: #{tpu_custom_call.1} parent=99 // pred_region
          %s1431 = sand.u32 %s231, 1
          %s1432 = scalar_lea.sflag [#allocation7], %s1431
          %s1433 = sand.u32 %s231, 1
          %s1434 = smul.addr %s1433, 8
          %s1435 = scalar_lea.vmem [#allocation13], %s1434
          %1436 = dma.done %s1432, 128
        $region104: #{tpu_custom_call.1} parent=99 // pred_fallthru
          _
        // Predicated region
        $region105: #{tpu_custom_call.1} parent=99 // pred_check
          %p1437 = pneg %p274
        $region106: #{tpu_custom_call.1} parent=99 // pred_check_branch
          %1439 = sbr.rel (%p1437) target = $region108
        $region107: #{tpu_custom_call.1} parent=99 // pred_region
          %s1440 = sand.u32 %s259, 1
          %s1441 = scalar_lea.sflag [#allocation15], %s1440
          %s1442 = sand.u32 %s259, 1
          %s1443 = smul.addr %s1442, 8
          %s1444 = scalar_lea.vmem [#allocation14], %s1443
          %1445 = dma.done %s1441, 128
        $region108: #{tpu_custom_call.1} parent=99 // pred_fallthru
          _
      $region100: #{tpu_custom_call.1} parent=5 // pred_fallthru
        _
    $region6: #{tpu_custom_call.1} parent=1 // loop_footer
      %s32 = sadd.s32 1, %s28
    $region7: #{tpu_custom_call.1} parent=1 // loop_footer_branch
      %27 = sbr.rel target = $region3
    $region8: #{tpu_custom_call.1} parent=1 // loop_exit
      _
    %1446 = vsyncpa [#allocation6], 1
    %s1447 = scalar_lea.sflag [#allocation6], 1
    %1448 = vsyncpa %s1447, 1
    %1449 = vsyncpa [#allocation9], 1
    %1450 = vsyncpa [#allocation12], 1
    %1451 = vsyncpa [#allocation7], 1
    %s1452 = scalar_lea.sflag [#allocation7], 1
    %1453 = vsyncpa %s1452, 1
    %1454 = vsyncpa [#allocation15], 1
    %s1455 = scalar_lea.sflag [#allocation15], 1
    %1456 = vsyncpa %s1455, 1
  %1457 = vsyncmov [#allocation3]
  %s1458 = vpop.sfrf %1457
  %p1459 = scmp.eq.s32.totalorder %s1458, 0
  %p1460 = pneg %p1459
  %1462 = shalt.err (%p1460)
  %s1463 = scalar_lea.sflag [#allocation3], 1
  %1464 = vsyncmov %s1463
  %s1465 = vpop.sfrf %1464
  %p1466 = scmp.eq.s32.totalorder %s1465, 0
  %p1467 = pneg %p1466
  %1469 = shalt.err (%p1467)

</llo_original>
